<compile_context>
chip_gen: v5e
topology: v5e:2x2
jax: 0.10.0
libtpu: 0.0.40
codegen_flags: <defaults>
</compile_context>

<pallas_src>
import functools

import jax
import jax.numpy as jnp
import numpy as np
from jax.experimental import pallas as pl
from jax.experimental.pallas import tpu as pltpu


def _merge_run_kernel(xs_ref, xr_ref, w1_ref, w2_ref, w3_ref,
                      b1_ref, b2_ref, b3_ref, out_ref,
                      *, th, w, c, h, cdt):
    # xs_ref : (1, th+6, w+4, c)  padded input strip (compute dtype, e.g. bf16)
    # xr_ref : (1, th*w, c)       un-padded residual strip (f32)
    # w*_ref : (9*cin, c)         taps stacked along K (kx-major, ky-minor), bf16
    # b*_ref : (1, c)             biases, f32
    # out_ref: (1, th*w, c)       f32 output strip
    s = pl.program_id(1)
    slab = xs_ref[0]                       # (th+6, w+4, c)
    m2 = (th + 2) * w                      # halo-extended row count * w
    m = th * w

    # 5 column-shifted copies of the slab cover conv1 (dx=1,2,3) and
    # conv2 (dx=0,2,4).  Only the W axis is sliced here; the per-ky slices
    # below touch only the leading axis.
    shifts = [slab[:, dx:dx + w, :] for dx in range(5)]

    def im2col(dx_list, dy_list):
        cols = []
        for dx in dx_list:                 # kx-major ...
            sh = shifts[dx]
            for dy in dy_list:             # ... ky-minor (matches weight stacking)
                cols.append(sh[dy:dy + th + 2, :, :].reshape(m2, c))
        return jnp.concatenate(cols, axis=1)            # (m2, 9*c)

    # conv1 (pad=1, dil=1) and conv2 (pad=2, dil=2): one wide-K MXU matmul each.
    o1 = jnp.dot(im2col([1, 2, 3], [1, 2, 3]), w1_ref[...],
                 preferred_element_type=jnp.float32) + b1_ref[...]
    o2 = jnp.dot(im2col([0, 2, 4], [0, 2, 4]), w2_ref[...],
                 preferred_element_type=jnp.float32) + b2_ref[...]
    o1 = jnp.maximum(o1, 0.0)
    o2 = jnp.maximum(o2, 0.0)

    # Halo rows that fall outside the image are conv3's *zero padding*, not
    # computed activations -> mask them to zero.  Row index of flat element
    # f = e*w + x is e; e >= k  <=>  f >= k*w.
    a = s * th                                            # first real row
    f = jax.lax.broadcasted_iota(jnp.int32, (m2, 1), 0)
    valid = jnp.logical_and(f >= (1 - a) * w, f < (h - a + 1) * w)
    o1 = jnp.where(valid, o1, 0.0).astype(cdt)
    o2 = jnp.where(valid, o2, 0.0).astype(cdt)

    # conv3 input = zero-column-padded channel concat [out1 | out2] (values
    # only, no scratch buffer, no re-zeroing).
    cat = jnp.concatenate([o1, o2], axis=1).reshape(th + 2, w, 2 * c)
    zcol = jnp.zeros((th + 2, 1, 2 * c), cdt)
    catp = jnp.concatenate([zcol, cat, zcol], axis=1)     # (th+2, w+2, 2c)

    cshifts = [catp[:, dx:dx + w, :] for dx in range(3)]
    cols = []
    for dx in range(3):
        for dy in range(3):
            cols.append(cshifts[dx][dy:dy + th, :, :].reshape(m, 2 * c))
    im3 = jnp.concatenate(cols, axis=1)                   # (m, 18*c)

    acc = jnp.dot(im3, w3_ref[...],
                  preferred_element_type=jnp.float32) + b3_ref[...]
    c_out = jnp.maximum(acc, 0.0)

    out_ref[0] = (c_out + xr_ref[0].astype(jnp.float32)).astype(out_ref.dtype)


def merge_run_pallas(x, w1, w2, w3, b1, b2, b3, *, tile_h=None,
                     compute_dtype=jnp.bfloat16,
                     vmem_limit_bytes=64 * 1024 * 1024):
    """x: (N, H, W, C) f32 NHWC.  w1/w2: (3,3,C,C), w3: (3,3,2C,C) HWIO."""
    N, H, W, C = x.shape
    assert w1.shape == (3, 3, C, C) and w2.shape == (3, 3, C, C)
    assert w3.shape == (3, 3, 2 * C, C)

    if tile_h is None:
        # largest row-strip divisor of H whose (over-estimated) working set
        # stays well inside a v7x-safe VMEM budget.
        budget = 32 * 1024 * 1024
        tile_h = 1
        for cand in range(1, H + 1):
            if H % cand == 0 and 160 * cand * W * C <= budget:
                tile_h = cand
    assert H % tile_h == 0, "tile_h must divide H"
    TH = tile_h
    S = H // TH

    # Pad rows by 3 (covers the conv3 halo recompute), cols by 2 (dilation-2
    # pad).  Overlapping row strips are materialized in HBM so plain
    # (non-overlapping) BlockSpecs handle the halo'd DMA.
    xpp = jnp.pad(x, ((0, 0), (3, 3), (2, 2), (0, 0))).astype(compute_dtype)
    xs = jnp.stack([xpp[:, s * TH: s * TH + TH + 6] for s in range(S)], axis=1)
    xs = xs.reshape(N * S, TH + 6, W + 4, C)
    # residual input, pre-shaped to the kernel's (TH*W, C) output layout
    xr = x.reshape(N * S, TH * W, C)

    def stack_taps(wt):   # (3,3,cin,cout) -> (9*cin, cout), kx-major / ky-minor
        return jnp.concatenate([wt[ky, kx] for kx in range(3) for ky in range(3)],
                               axis=0).astype(compute_dtype)

    w1m, w2m, w3m = stack_taps(w1), stack_taps(w2), stack_taps(w3)
    b1r = b1.reshape(1, C).astype(jnp.float32)
    b2r = b2.reshape(1, C).astype(jnp.float32)
    b3r = b3.reshape(1, C).astype(jnp.float32)

    kernel = functools.partial(_merge_run_kernel, th=TH, w=W, c=C, h=H,
                               cdt=compute_dtype)

    strip = lambda n, s: (n * S + s, 0, 0)
    strip4 = lambda n, s: (n * S + s, 0, 0, 0)
    wfull = lambda n, s: (0, 0)

    grid_spec = pltpu.PrefetchScalarGridSpec(
        num_scalar_prefetch=0,
        grid=(N, S),
        in_specs=[
            pl.BlockSpec((1, TH + 6, W + 4, C), strip4),   # padded input strip
            pl.BlockSpec((1, TH * W, C), strip),           # residual strip
            pl.BlockSpec((9 * C, C), wfull),               # conv1 weight (K-stacked)
            pl.BlockSpec((9 * C, C), wfull),               # conv2 weight
            pl.BlockSpec((9 * 2 * C, C), wfull),           # conv3 weight (concat in K)
            pl.BlockSpec((1, C), wfull),
            pl.BlockSpec((1, C), wfull),
            pl.BlockSpec((1, C), wfull),
        ],
        out_specs=pl.BlockSpec((1, TH * W, C), strip),
    )

    out = pl.pallas_call(
        kernel,
        out_shape=jax.ShapeDtypeStruct((N * S, TH * W, C), jnp.float32),
        grid_spec=grid_spec,
        compiler_params=pltpu.CompilerParams(
            dimension_semantics=("parallel", "parallel"),
            vmem_limit_bytes=vmem_limit_bytes),
    )(xs, xr, w1m, w2m, w3m, b1r, b2r, b3r)

    return out.reshape(N, H, W, C)


def _conv_ref(x, w, b, dilation, padding):
    y = jax.lax.conv_general_dilated(
        x, w, window_strides=(1, 1),
        padding=((padding, padding), (padding, padding)),
        rhs_dilation=(dilation, dilation),
        dimension_numbers=("NHWC", "HWIO", "NHWC"))
    return jax.nn.relu(y + b.reshape(1, 1, 1, -1))


def merge_run_reference(x_nhwc, w1, w2, w3, b1, b2, b3):
    out1 = _conv_ref(x_nhwc, w1, b1, 1, 1)
    out2 = _conv_ref(x_nhwc, w2, b2, 2, 2)
    c = jnp.concatenate([out1, out2], axis=-1)
    c_out = _conv_ref(c, w3, b3, 1, 1)
    return c_out + x_nhwc


if __name__ == "__main__":
    # Small shapes: batch=2, channels=4 (in == out so the residual is valid),
    # spatial 16x16.  PyTorch-style NCHW input is transposed to NHWC here.
    N, C, H, W = 2, 4, 16, 16
    key = jax.random.PRNGKey(0)
    kx_, k1, k2, k3, kb1, kb2, kb3 = jax.random.split(key, 7)

    x_nchw = jax.random.normal(kx_, (N, C, H, W), dtype=jnp.float32)
    x_nhwc = jnp.transpose(x_nchw, (0, 2, 3, 1))

    s1 = 1.0 / np.sqrt(C * 9)
    s3 = 1.0 / np.sqrt(2 * C * 9)
    w1 = jax.random.normal(k1, (3, 3, C, C), jnp.float32) * s1
    w2 = jax.random.normal(k2, (3, 3, C, C), jnp.float32) * s1
    w3 = jax.random.normal(k3, (3, 3, 2 * C, C), jnp.float32) * s3
    b1 = jax.random.normal(kb1, (C,), jnp.float32) * 0.01
    b2 = jax.random.normal(kb2, (C,), jnp.float32) * 0.01
    b3 = jax.random.normal(kb3, (C,), jnp.float32) * 0.01

    # tile_h=8 -> 2 row strips per image: exercises both the image-boundary and
    # the interior-halo paths of the strip tiling.
    out = merge_run_pallas(x_nhwc, w1, w2, w3, b1, b2, b3, tile_h=8)
    out = jax.block_until_ready(out)

    ref = merge_run_reference(x_nhwc, w1, w2, w3, b1, b2, b3)
    # bf16 matmul inputs with f32 accumulation -> bf16-level tolerance.
    np.testing.assert_allclose(np.asarray(out), np.asarray(ref),
                               rtol=5e-2, atol=5e-2)
    print("KERNEL_OK")
</pallas_src>

<mosaic_0001>
module attributes {stable_mosaic.version = 11 : i64} {
  func.func @_merge_run_kernel(%arg0: i32, %arg1: i32, %arg2: memref<1x14x20x4xbf16, #tpu.memory_space<vmem>>, %arg3: memref<1x128x4xf32, #tpu.memory_space<vmem>>, %arg4: memref<36x4xbf16, #tpu.memory_space<vmem>>, %arg5: memref<36x4xbf16, #tpu.memory_space<vmem>>, %arg6: memref<72x4xbf16, #tpu.memory_space<vmem>>, %arg7: memref<1x4xf32, #tpu.memory_space<vmem>>, %arg8: memref<1x4xf32, #tpu.memory_space<vmem>>, %arg9: memref<1x4xf32, #tpu.memory_space<vmem>>, %arg10: memref<1x128x4xf32, #tpu.memory_space<vmem>>) attributes {dimension_semantics = [#tpu.dimension_semantics<parallel>, #tpu.dimension_semantics<parallel>], iteration_bounds = array<i64: 2, 2>, scalar_prefetch = 0 : i64, scratch_operands = 0 : i64, tpu.core_type = #tpu.core_type<tc>, window_params = [{transform_indices = @transform_0, window_bounds = array<i64: 1, 14, 20, 4>}, {transform_indices = @transform_1, window_bounds = array<i64: 1, 128, 4>}, {pipeline_mode = #tpu.pipeline_mode<synchronous>, transform_indices = @transform_2, window_bounds = array<i64: 36, 4>}, {pipeline_mode = #tpu.pipeline_mode<synchronous>, transform_indices = @transform_3, window_bounds = array<i64: 36, 4>}, {pipeline_mode = #tpu.pipeline_mode<synchronous>, transform_indices = @transform_4, window_bounds = array<i64: 72, 4>}, {pipeline_mode = #tpu.pipeline_mode<synchronous>, transform_indices = @transform_5, window_bounds = array<i64: 1, 4>}, {pipeline_mode = #tpu.pipeline_mode<synchronous>, transform_indices = @transform_6, window_bounds = array<i64: 1, 4>}, {pipeline_mode = #tpu.pipeline_mode<synchronous>, transform_indices = @transform_7, window_bounds = array<i64: 1, 4>}, {transform_indices = @transform_8, window_bounds = array<i64: 1, 128, 4>}]} {
    %c0 = arith.constant 0 : index
    %c0_0 = arith.constant 0 : index
    %c0_1 = arith.constant 0 : index
    %c0_2 = arith.constant 0 : index
    %0 = vector.load %arg2[%c0, %c0_0, %c0_1, %c0_2] : memref<1x14x20x4xbf16, #tpu.memory_space<vmem>>, vector<1x14x20x4xbf16>
    %1 = vector.shape_cast %0 : vector<1x14x20x4xbf16> to vector<14x20x4xbf16>
    %2 = vector.extract_strided_slice %1 {offsets = [0, 0, 0], sizes = [14, 16, 4], strides = [1, 1, 1]} : vector<14x20x4xbf16> to vector<14x16x4xbf16>
    %3 = vector.extract_strided_slice %1 {offsets = [0, 1, 0], sizes = [14, 16, 4], strides = [1, 1, 1]} : vector<14x20x4xbf16> to vector<14x16x4xbf16>
    %4 = vector.extract_strided_slice %1 {offsets = [0, 2, 0], sizes = [14, 16, 4], strides = [1, 1, 1]} : vector<14x20x4xbf16> to vector<14x16x4xbf16>
    %5 = vector.extract_strided_slice %1 {offsets = [0, 3, 0], sizes = [14, 16, 4], strides = [1, 1, 1]} : vector<14x20x4xbf16> to vector<14x16x4xbf16>
    %6 = vector.extract_strided_slice %1 {offsets = [0, 4, 0], sizes = [14, 16, 4], strides = [1, 1, 1]} : vector<14x20x4xbf16> to vector<14x16x4xbf16>
    %7 = vector.extract_strided_slice %3 {offsets = [1, 0, 0], sizes = [10, 16, 4], strides = [1, 1, 1]} : vector<14x16x4xbf16> to vector<10x16x4xbf16>
    %8 = vector.shape_cast %7 : vector<10x16x4xbf16> to vector<160x4xbf16>
    %9 = vector.extract_strided_slice %3 {offsets = [2, 0, 0], sizes = [10, 16, 4], strides = [1, 1, 1]} : vector<14x16x4xbf16> to vector<10x16x4xbf16>
    %10 = vector.shape_cast %9 : vector<10x16x4xbf16> to vector<160x4xbf16>
    %11 = vector.extract_strided_slice %3 {offsets = [3, 0, 0], sizes = [10, 16, 4], strides = [1, 1, 1]} : vector<14x16x4xbf16> to vector<10x16x4xbf16>
    %12 = vector.shape_cast %11 : vector<10x16x4xbf16> to vector<160x4xbf16>
    %13 = vector.extract_strided_slice %4 {offsets = [1, 0, 0], sizes = [10, 16, 4], strides = [1, 1, 1]} : vector<14x16x4xbf16> to vector<10x16x4xbf16>
    %14 = vector.shape_cast %13 : vector<10x16x4xbf16> to vector<160x4xbf16>
    %15 = vector.extract_strided_slice %4 {offsets = [2, 0, 0], sizes = [10, 16, 4], strides = [1, 1, 1]} : vector<14x16x4xbf16> to vector<10x16x4xbf16>
    %16 = vector.shape_cast %15 : vector<10x16x4xbf16> to vector<160x4xbf16>
    %17 = vector.extract_strided_slice %4 {offsets = [3, 0, 0], sizes = [10, 16, 4], strides = [1, 1, 1]} : vector<14x16x4xbf16> to vector<10x16x4xbf16>
    %18 = vector.shape_cast %17 : vector<10x16x4xbf16> to vector<160x4xbf16>
    %19 = vector.extract_strided_slice %5 {offsets = [1, 0, 0], sizes = [10, 16, 4], strides = [1, 1, 1]} : vector<14x16x4xbf16> to vector<10x16x4xbf16>
    %20 = vector.shape_cast %19 : vector<10x16x4xbf16> to vector<160x4xbf16>
    %21 = vector.extract_strided_slice %5 {offsets = [2, 0, 0], sizes = [10, 16, 4], strides = [1, 1, 1]} : vector<14x16x4xbf16> to vector<10x16x4xbf16>
    %22 = vector.shape_cast %21 : vector<10x16x4xbf16> to vector<160x4xbf16>
    %23 = vector.extract_strided_slice %5 {offsets = [3, 0, 0], sizes = [10, 16, 4], strides = [1, 1, 1]} : vector<14x16x4xbf16> to vector<10x16x4xbf16>
    %24 = vector.shape_cast %23 : vector<10x16x4xbf16> to vector<160x4xbf16>
    %25 = tpu.concatenate %8, %10, %12, %14, %16, %18, %20, %22, %24 in 1 : vector<160x4xbf16>, vector<160x4xbf16>, vector<160x4xbf16>, vector<160x4xbf16>, vector<160x4xbf16>, vector<160x4xbf16>, vector<160x4xbf16>, vector<160x4xbf16>, vector<160x4xbf16> -> vector<160x36xbf16>
    %c0_3 = arith.constant 0 : index
    %c0_4 = arith.constant 0 : index
    %26 = vector.load %arg4[%c0_3, %c0_4] : memref<36x4xbf16, #tpu.memory_space<vmem>>, vector<36x4xbf16>
    %cst = arith.constant dense<0.000000e+00> : vector<160x4xf32>
    %27 = tpu.matmul %25, %26, %cst {dimension_numbers = #tpu.dot_dimension_numbers<[1], [0], [0], [1], [0, 0, 1, 1], [], []>} : vector<160x36xbf16>, vector<36x4xbf16>, vector<160x4xf32> -> vector<160x4xf32>
    %c0_5 = arith.constant 0 : index
    %c0_6 = arith.constant 0 : index
    %28 = vector.load %arg7[%c0_5, %c0_6] : memref<1x4xf32, #tpu.memory_space<vmem>>, vector<1x4xf32>
    %29 = vector.broadcast %28 : vector<1x4xf32> to vector<160x4xf32>
    %30 = arith.addf %27, %29 : vector<160x4xf32>
    %31 = vector.extract_strided_slice %2 {offsets = [0, 0, 0], sizes = [10, 16, 4], strides = [1, 1, 1]} : vector<14x16x4xbf16> to vector<10x16x4xbf16>
    %32 = vector.shape_cast %31 : vector<10x16x4xbf16> to vector<160x4xbf16>
    %33 = vector.extract_strided_slice %2 {offsets = [2, 0, 0], sizes = [10, 16, 4], strides = [1, 1, 1]} : vector<14x16x4xbf16> to vector<10x16x4xbf16>
    %34 = vector.shape_cast %33 : vector<10x16x4xbf16> to vector<160x4xbf16>
    %35 = vector.extract_strided_slice %2 {offsets = [4, 0, 0], sizes = [10, 16, 4], strides = [1, 1, 1]} : vector<14x16x4xbf16> to vector<10x16x4xbf16>
    %36 = vector.shape_cast %35 : vector<10x16x4xbf16> to vector<160x4xbf16>
    %37 = vector.extract_strided_slice %4 {offsets = [0, 0, 0], sizes = [10, 16, 4], strides = [1, 1, 1]} : vector<14x16x4xbf16> to vector<10x16x4xbf16>
    %38 = vector.shape_cast %37 : vector<10x16x4xbf16> to vector<160x4xbf16>
    %39 = vector.extract_strided_slice %4 {offsets = [2, 0, 0], sizes = [10, 16, 4], strides = [1, 1, 1]} : vector<14x16x4xbf16> to vector<10x16x4xbf16>
    %40 = vector.shape_cast %39 : vector<10x16x4xbf16> to vector<160x4xbf16>
    %41 = vector.extract_strided_slice %4 {offsets = [4, 0, 0], sizes = [10, 16, 4], strides = [1, 1, 1]} : vector<14x16x4xbf16> to vector<10x16x4xbf16>
    %42 = vector.shape_cast %41 : vector<10x16x4xbf16> to vector<160x4xbf16>
    %43 = vector.extract_strided_slice %6 {offsets = [0, 0, 0], sizes = [10, 16, 4], strides = [1, 1, 1]} : vector<14x16x4xbf16> to vector<10x16x4xbf16>
    %44 = vector.shape_cast %43 : vector<10x16x4xbf16> to vector<160x4xbf16>
    %45 = vector.extract_strided_slice %6 {offsets = [2, 0, 0], sizes = [10, 16, 4], strides = [1, 1, 1]} : vector<14x16x4xbf16> to vector<10x16x4xbf16>
    %46 = vector.shape_cast %45 : vector<10x16x4xbf16> to vector<160x4xbf16>
    %47 = vector.extract_strided_slice %6 {offsets = [4, 0, 0], sizes = [10, 16, 4], strides = [1, 1, 1]} : vector<14x16x4xbf16> to vector<10x16x4xbf16>
    %48 = vector.shape_cast %47 : vector<10x16x4xbf16> to vector<160x4xbf16>
    %49 = tpu.concatenate %32, %34, %36, %38, %40, %42, %44, %46, %48 in 1 : vector<160x4xbf16>, vector<160x4xbf16>, vector<160x4xbf16>, vector<160x4xbf16>, vector<160x4xbf16>, vector<160x4xbf16>, vector<160x4xbf16>, vector<160x4xbf16>, vector<160x4xbf16> -> vector<160x36xbf16>
    %c0_7 = arith.constant 0 : index
    %c0_8 = arith.constant 0 : index
    %50 = vector.load %arg5[%c0_7, %c0_8] : memref<36x4xbf16, #tpu.memory_space<vmem>>, vector<36x4xbf16>
    %cst_9 = arith.constant dense<0.000000e+00> : vector<160x4xf32>
    %51 = tpu.matmul %49, %50, %cst_9 {dimension_numbers = #tpu.dot_dimension_numbers<[1], [0], [0], [1], [0, 0, 1, 1], [], []>} : vector<160x36xbf16>, vector<36x4xbf16>, vector<160x4xf32> -> vector<160x4xf32>
    %c0_10 = arith.constant 0 : index
    %c0_11 = arith.constant 0 : index
    %52 = vector.load %arg8[%c0_10, %c0_11] : memref<1x4xf32, #tpu.memory_space<vmem>>, vector<1x4xf32>
    %53 = vector.broadcast %52 : vector<1x4xf32> to vector<160x4xf32>
    %54 = arith.addf %51, %53 : vector<160x4xf32>
    %cst_12 = arith.constant 0.000000e+00 : f32
    %55 = vector.broadcast %cst_12 : f32 to vector<160x4xf32>
    %56 = arith.maximumf %30, %55 : vector<160x4xf32>
    %cst_13 = arith.constant 0.000000e+00 : f32
    %57 = vector.broadcast %cst_13 : f32 to vector<160x4xf32>
    %58 = arith.maximumf %54, %57 : vector<160x4xf32>
    %c8_i32 = arith.constant 8 : i32
    %59 = arith.muli %arg1, %c8_i32 : i32
    %60 = tpu.iota {dimensions = array<i32: 0>} : vector<160x1xi32>
    %c1_i32 = arith.constant 1 : i32
    %61 = arith.subi %c1_i32, %59 : i32
    %c16_i32 = arith.constant 16 : i32
    %62 = arith.muli %61, %c16_i32 : i32
    %63 = vector.broadcast %62 : i32 to vector<160x1xi32>
    %64 = arith.cmpi sge, %60, %63 : vector<160x1xi32>
    %c16_i32_14 = arith.constant 16 : i32
    %65 = arith.subi %c16_i32_14, %59 : i32
    %c1_i32_15 = arith.constant 1 : i32
    %66 = arith.addi %65, %c1_i32_15 : i32
    %c16_i32_16 = arith.constant 16 : i32
    %67 = arith.muli %66, %c16_i32_16 : i32
    %68 = vector.broadcast %67 : i32 to vector<160x1xi32>
    %69 = arith.cmpi slt, %60, %68 : vector<160x1xi32>
    %70 = arith.andi %64, %69 : vector<160x1xi1>
    %cst_17 = arith.constant 0.000000e+00 : f32
    %71 = vector.shape_cast %70 : vector<160x1xi1> to vector<160x1xi1>
    %72 = vector.broadcast %71 : vector<160x1xi1> to vector<160x4xi1>
    %73 = vector.broadcast %cst_17 : f32 to vector<160x4xf32>
    %74 = arith.select %72, %56, %73 : vector<160x4xi1>, vector<160x4xf32>
    %75 = arith.truncf %74 : vector<160x4xf32> to vector<160x4xbf16>
    %cst_18 = arith.constant 0.000000e+00 : f32
    %76 = vector.shape_cast %70 : vector<160x1xi1> to vector<160x1xi1>
    %77 = vector.broadcast %76 : vector<160x1xi1> to vector<160x4xi1>
    %78 = vector.broadcast %cst_18 : f32 to vector<160x4xf32>
    %79 = arith.select %77, %58, %78 : vector<160x4xi1>, vector<160x4xf32>
    %80 = arith.truncf %79 : vector<160x4xf32> to vector<160x4xbf16>
    %81 = tpu.concatenate %75, %80 in 1 : vector<160x4xbf16>, vector<160x4xbf16> -> vector<160x8xbf16>
    %82 = vector.shape_cast %81 : vector<160x8xbf16> to vector<10x16x8xbf16>
    %cst_19 = arith.constant 0.000000e+00 : bf16
    %83 = vector.broadcast %cst_19 : bf16 to vector<10x1x8xbf16>
    %84 = tpu.concatenate %83, %82, %83 in 1 : vector<10x1x8xbf16>, vector<10x16x8xbf16>, vector<10x1x8xbf16> -> vector<10x18x8xbf16>
    %85 = vector.extract_strided_slice %84 {offsets = [0, 0, 0], sizes = [10, 16, 8], strides = [1, 1, 1]} : vector<10x18x8xbf16> to vector<10x16x8xbf16>
    %86 = vector.extract_strided_slice %84 {offsets = [0, 1, 0], sizes = [10, 16, 8], strides = [1, 1, 1]} : vector<10x18x8xbf16> to vector<10x16x8xbf16>
    %87 = vector.extract_strided_slice %84 {offsets = [0, 2, 0], sizes = [10, 16, 8], strides = [1, 1, 1]} : vector<10x18x8xbf16> to vector<10x16x8xbf16>
    %88 = vector.extract_strided_slice %85 {offsets = [0, 0, 0], sizes = [8, 16, 8], strides = [1, 1, 1]} : vector<10x16x8xbf16> to vector<8x16x8xbf16>
    %89 = vector.shape_cast %88 : vector<8x16x8xbf16> to vector<128x8xbf16>
    %90 = vector.extract_strided_slice %85 {offsets = [1, 0, 0], sizes = [8, 16, 8], strides = [1, 1, 1]} : vector<10x16x8xbf16> to vector<8x16x8xbf16>
    %91 = vector.shape_cast %90 : vector<8x16x8xbf16> to vector<128x8xbf16>
    %92 = vector.extract_strided_slice %85 {offsets = [2, 0, 0], sizes = [8, 16, 8], strides = [1, 1, 1]} : vector<10x16x8xbf16> to vector<8x16x8xbf16>
    %93 = vector.shape_cast %92 : vector<8x16x8xbf16> to vector<128x8xbf16>
    %94 = vector.extract_strided_slice %86 {offsets = [0, 0, 0], sizes = [8, 16, 8], strides = [1, 1, 1]} : vector<10x16x8xbf16> to vector<8x16x8xbf16>
    %95 = vector.shape_cast %94 : vector<8x16x8xbf16> to vector<128x8xbf16>
    %96 = vector.extract_strided_slice %86 {offsets = [1, 0, 0], sizes = [8, 16, 8], strides = [1, 1, 1]} : vector<10x16x8xbf16> to vector<8x16x8xbf16>
    %97 = vector.shape_cast %96 : vector<8x16x8xbf16> to vector<128x8xbf16>
    %98 = vector.extract_strided_slice %86 {offsets = [2, 0, 0], sizes = [8, 16, 8], strides = [1, 1, 1]} : vector<10x16x8xbf16> to vector<8x16x8xbf16>
    %99 = vector.shape_cast %98 : vector<8x16x8xbf16> to vector<128x8xbf16>
    %100 = vector.extract_strided_slice %87 {offsets = [0, 0, 0], sizes = [8, 16, 8], strides = [1, 1, 1]} : vector<10x16x8xbf16> to vector<8x16x8xbf16>
    %101 = vector.shape_cast %100 : vector<8x16x8xbf16> to vector<128x8xbf16>
    %102 = vector.extract_strided_slice %87 {offsets = [1, 0, 0], sizes = [8, 16, 8], strides = [1, 1, 1]} : vector<10x16x8xbf16> to vector<8x16x8xbf16>
    %103 = vector.shape_cast %102 : vector<8x16x8xbf16> to vector<128x8xbf16>
    %104 = vector.extract_strided_slice %87 {offsets = [2, 0, 0], sizes = [8, 16, 8], strides = [1, 1, 1]} : vector<10x16x8xbf16> to vector<8x16x8xbf16>
    %105 = vector.shape_cast %104 : vector<8x16x8xbf16> to vector<128x8xbf16>
    %106 = tpu.concatenate %89, %91, %93, %95, %97, %99, %101, %103, %105 in 1 : vector<128x8xbf16>, vector<128x8xbf16>, vector<128x8xbf16>, vector<128x8xbf16>, vector<128x8xbf16>, vector<128x8xbf16>, vector<128x8xbf16>, vector<128x8xbf16>, vector<128x8xbf16> -> vector<128x72xbf16>
    %c0_20 = arith.constant 0 : index
    %c0_21 = arith.constant 0 : index
    %107 = vector.load %arg6[%c0_20, %c0_21] : memref<72x4xbf16, #tpu.memory_space<vmem>>, vector<72x4xbf16>
    %cst_22 = arith.constant dense<0.000000e+00> : vector<128x4xf32>
    %108 = tpu.matmul %106, %107, %cst_22 {dimension_numbers = #tpu.dot_dimension_numbers<[1], [0], [0], [1], [0, 0, 1, 1], [], []>} : vector<128x72xbf16>, vector<72x4xbf16>, vector<128x4xf32> -> vector<128x4xf32>
    %c0_23 = arith.constant 0 : index
    %c0_24 = arith.constant 0 : index
    %109 = vector.load %arg9[%c0_23, %c0_24] : memref<1x4xf32, #tpu.memory_space<vmem>>, vector<1x4xf32>
    %110 = vector.broadcast %109 : vector<1x4xf32> to vector<128x4xf32>
    %111 = arith.addf %108, %110 : vector<128x4xf32>
    %cst_25 = arith.constant 0.000000e+00 : f32
    %112 = vector.broadcast %cst_25 : f32 to vector<128x4xf32>
    %113 = arith.maximumf %111, %112 : vector<128x4xf32>
    %c0_26 = arith.constant 0 : index
    %c0_27 = arith.constant 0 : index
    %c0_28 = arith.constant 0 : index
    %114 = vector.load %arg3[%c0_26, %c0_27, %c0_28] : memref<1x128x4xf32, #tpu.memory_space<vmem>>, vector<1x128x4xf32>
    %115 = vector.shape_cast %114 : vector<1x128x4xf32> to vector<128x4xf32>
    %116 = arith.addf %113, %115 : vector<128x4xf32>
    %c0_29 = arith.constant 0 : index
    %c0_30 = arith.constant 0 : index
    %c0_31 = arith.constant 0 : index
    %117 = vector.load %arg10[%c0_29, %c0_30, %c0_31] : memref<1x128x4xf32, #tpu.memory_space<vmem>>, vector<1x128x4xf32>
    %118 = vector.shape_cast %117 : vector<1x128x4xf32> to vector<128x4xf32>
    %119 = vector.shape_cast %116 : vector<128x4xf32> to vector<1x128x4xf32>
    tpu.vector_store %arg10[%c0_29, %c0_30, %c0_31], %119 {strides = array<i32>} : memref<1x128x4xf32, #tpu.memory_space<vmem>>, vector<1x128x4xf32>,
    return
  }
  func.func @transform_0(%arg0: i32, %arg1: i32) -> (i32, i32, i32, i32) {
    %c2_i32 = arith.constant 2 : i32
    %0 = arith.muli %arg0, %c2_i32 : i32
    %1 = arith.addi %0, %arg1 : i32
    %c0_i32 = arith.constant 0 : i32
    %c0_i32_0 = arith.constant 0 : i32
    %c0_i32_1 = arith.constant 0 : i32
    %c0_i32_2 = arith.constant 0 : i32
    return %1, %c0_i32, %c0_i32_0, %c0_i32_1 : i32, i32, i32, i32
  }
  func.func @transform_1(%arg0: i32, %arg1: i32) -> (i32, i32, i32) {
    %c2_i32 = arith.constant 2 : i32
    %0 = arith.muli %arg0, %c2_i32 : i32
    %1 = arith.addi %0, %arg1 : i32
    %c0_i32 = arith.constant 0 : i32
    %c0_i32_0 = arith.constant 0 : i32
    %c0_i32_1 = arith.constant 0 : i32
    return %1, %c0_i32, %c0_i32_0 : i32, i32, i32
  }
  func.func @transform_2(%arg0: i32, %arg1: i32) -> (i32, i32) {
    %c0_i32 = arith.constant 0 : i32
    %c0_i32_0 = arith.constant 0 : i32
    %c0_i32_1 = arith.constant 0 : i32
    return %c0_i32, %c0_i32_0 : i32, i32
  }
  func.func @transform_3(%arg0: i32, %arg1: i32) -> (i32, i32) {
    %c0_i32 = arith.constant 0 : i32
    %c0_i32_0 = arith.constant 0 : i32
    %c0_i32_1 = arith.constant 0 : i32
    return %c0_i32, %c0_i32_0 : i32, i32
  }
  func.func @transform_4(%arg0: i32, %arg1: i32) -> (i32, i32) {
    %c0_i32 = arith.constant 0 : i32
    %c0_i32_0 = arith.constant 0 : i32
    %c0_i32_1 = arith.constant 0 : i32
    return %c0_i32, %c0_i32_0 : i32, i32
  }
  func.func @transform_5(%arg0: i32, %arg1: i32) -> (i32, i32) {
    %c0_i32 = arith.constant 0 : i32
    %c0_i32_0 = arith.constant 0 : i32
    %c0_i32_1 = arith.constant 0 : i32
    return %c0_i32, %c0_i32_0 : i32, i32
  }
  func.func @transform_6(%arg0: i32, %arg1: i32) -> (i32, i32) {
    %c0_i32 = arith.constant 0 : i32
    %c0_i32_0 = arith.constant 0 : i32
    %c0_i32_1 = arith.constant 0 : i32
    return %c0_i32, %c0_i32_0 : i32, i32
  }
  func.func @transform_7(%arg0: i32, %arg1: i32) -> (i32, i32) {
    %c0_i32 = arith.constant 0 : i32
    %c0_i32_0 = arith.constant 0 : i32
    %c0_i32_1 = arith.constant 0 : i32
    return %c0_i32, %c0_i32_0 : i32, i32
  }
  func.func @transform_8(%arg0: i32, %arg1: i32) -> (i32, i32, i32) {
    %c2_i32 = arith.constant 2 : i32
    %0 = arith.muli %arg0, %c2_i32 : i32
    %1 = arith.addi %0, %arg1 : i32
    %c0_i32 = arith.constant 0 : i32
    %c0_i32_0 = arith.constant 0 : i32
    %c0_i32_1 = arith.constant 0 : i32
    return %1, %c0_i32, %c0_i32_0 : i32, i32, i32
  }
}

</mosaic_0001>

<llo_original>
// kernel: tpu_custom_call.1
$region0: #{tpu_custom_call.1}
  #allocation0 [shape = 'u32[]', space=smem, size = 0x4, offset = 0x4, fixed_abs, tag = 'smem constant byte address 0x4 - core index']
  #allocation1 [shape = 'u32[72,128]{1,0:T(1,128)}', space=vmem, size = 0x9000, scoped, tag = 'internal scratch']
  %s0 = inlined_call_operand.vmem [shape: bf16[4,14,20,4], index: 0, kind: input, shape index: {}]
  %s1 = inlined_call_operand.vmem [shape: f32[4,128,4], index: 1, kind: input, shape index: {}]
  %s2 = inlined_call_operand.vmem [shape: bf16[36,4], index: 2, kind: input, shape index: {}]
  %s3 = inlined_call_operand.vmem [shape: bf16[36,4], index: 3, kind: input, shape index: {}]
  %s4 = inlined_call_operand.vmem [shape: bf16[72,4], index: 4, kind: input, shape index: {}]
  %s5 = inlined_call_operand.vmem [shape: f32[1,4], index: 5, kind: input, shape index: {}]
  %s6 = inlined_call_operand.vmem [shape: f32[1,4], index: 6, kind: input, shape index: {}]
  %s7 = inlined_call_operand.vmem [shape: f32[1,4], index: 7, kind: input, shape index: {}]
  %s8 = inlined_call_operand.vmem [shape: f32[4,128,4], index: 8, kind: output, shape index: {}]
  %s9 = sld [smem:[#allocation0]]
  $region65: #{tpu_custom_call.1} parent=0
    _
  %s11 = ssub.s32 1, %s9
  %s12 = scalar_select 0, %s11, %s9
  loop: start=0, step=1, limit=6
  $region2: #{tpu_custom_call.1} parent=0 // loop_pre_header
    _
  $region3: #{tpu_custom_call.1} parent=0 // loop_header
    %s14 = sphi 0, %s18
    %p15 = scmp.ge.s32.totalorder %s14, 6
    %s21 = sphi 0, %s33
    %s22 = sphi 0, %s29
    %s23 = sphi 0, %s21
    %s24 = sphi 0, %s22
    %s25 = sphi 0, %s23
    %s26 = sphi 0, %s24
    %s40 = sphi 0, %s42
    %s43 = sphi 0, %s40
    %s44 = sphi 0, %s43
    %s60 = sphi 0, %s44
    %s70 = sphi 0, %s72
    %s73 = sphi 0, %s70
    %s74 = sphi 0, %s73
    %s90 = sphi 0, %s74
    %s94 = sphi 0, %s94
    %s96 = sphi 0, %s94
    %s97 = sphi 0, %s96
    %s111 = sphi 0, %s97
    %s115 = sphi 0, %s115
    %s117 = sphi 0, %s115
    %s118 = sphi 0, %s117
    %s132 = sphi 0, %s118
    %s136 = sphi 0, %s136
    %s138 = sphi 0, %s136
    %s139 = sphi 0, %s138
    %s153 = sphi 0, %s139
    %s157 = sphi 0, %s157
    %s159 = sphi 0, %s157
    %s160 = sphi 0, %s159
    %s174 = sphi 0, %s160
    %s178 = sphi 0, %s178
    %s180 = sphi 0, %s178
    %s181 = sphi 0, %s180
    %s195 = sphi 0, %s181
    %s199 = sphi 0, %s199
    %s201 = sphi 0, %s199
    %s202 = sphi 0, %s201
    %s216 = sphi 0, %s202
    %s226 = sphi 0, %s228
    %s229 = sphi 0, %s226
    %s230 = sphi 0, %s229
    %s246 = sphi 0, %s230
  $region4: #{tpu_custom_call.1} parent=0 // loop_header_branch
    %17 = sbr.rel (%p15) target = $region8
  $region5: #{tpu_custom_call.1} parent=0 // loop_body
    %s19 = ssub.s32 %s14, 1
    %s20 = ssub.s32 %s14, 2
    %s27 = sadd.s32 1, %s22
    %p28 = scmp.ge.s32.totalorder %s27, 2
    %s29 = scalar_select %p28, 0, %s27
    %s30 = sadd.s32 1, %s21
    %s31 = scalar_select %p28, %s30, %s21
    %p32 = scmp.ge.s32.totalorder %s31, 2
    %s33 = scalar_select %p32, 0, %s31
    %s34 = smul.u32 %s21, 2
    %s35 = sadd.s32 %s34, %s22
    %s36 = smul.u32 %s33, 2
    %s37 = sadd.s32 %s36, %s29
    %s38 = ssub.s32 %s35, %s37
    %p39 = scmp.eq.s32.totalorder %s38, 0
    %s41 = sadd.s32 %s40, 1
    %s42 = scalar_select %p39, %s40, %s41
    %p45 = pneg %p39
    %p46 = scmp.eq.s32.totalorder %s14, 3
    %p47 = por %p45, %p46
    %p48 = scmp.ne.s32.totalorder %s40, %s43
    %p49 = scmp.eq.s32.totalorder %s14, 0
    %p50 = por %p48, %p49
    %p51 = scmp.ne.s32.totalorder %s40, %s43
    %p52 = scmp.eq.s32.totalorder %s19, 3
    %p53 = por %p51, %p52
    %p54 = scmp.ne.s32.totalorder %s43, %s44
    %p55 = scmp.eq.s32.totalorder %s19, 0
    %p56 = por %p54, %p55
    %p57 = scmp.ne.s32.totalorder %s43, %s44
    %p58 = scmp.eq.s32.totalorder %s20, 3
    %p59 = por %p57, %p58
    %p61 = scmp.ne.s32.totalorder %s44, %s60
    %p62 = scmp.eq.s32.totalorder %s20, 0
    %p63 = por %p61, %p62
    %s64 = smul.u32 %s21, 2
    %s65 = sadd.s32 %s64, %s22
    %s66 = smul.u32 %s33, 2
    %s67 = sadd.s32 %s66, %s29
    %s68 = ssub.s32 %s65, %s67
    %p69 = scmp.eq.s32.totalorder %s68, 0
    %s71 = sadd.s32 %s70, 1
    %s72 = scalar_select %p69, %s70, %s71
    %p75 = pneg %p69
    %p76 = scmp.eq.s32.totalorder %s14, 3
    %p77 = por %p75, %p76
    %p78 = scmp.ne.s32.totalorder %s70, %s73
    %p79 = scmp.eq.s32.totalorder %s14, 0
    %p80 = por %p78, %p79
    %p81 = scmp.ne.s32.totalorder %s70, %s73
    %p82 = scmp.eq.s32.totalorder %s19, 3
    %p83 = por %p81, %p82
    %p84 = scmp.ne.s32.totalorder %s73, %s74
    %p85 = scmp.eq.s32.totalorder %s19, 0
    %p86 = por %p84, %p85
    %p87 = scmp.ne.s32.totalorder %s73, %s74
    %p88 = scmp.eq.s32.totalorder %s20, 3
    %p89 = por %p87, %p88
    %p91 = scmp.ne.s32.totalorder %s74, %s90
    %p92 = scmp.eq.s32.totalorder %s20, 0
    %p93 = por %p91, %p92
    %s95 = sadd.s32 %s94, 1
    %p98 = scmp.eq.s32.totalorder %s14, 3
    %p99 = scmp.ne.s32.totalorder %s94, %s96
    %p100 = scmp.eq.s32.totalorder %s14, 0
    %p101 = por %p99, %p100
    %p102 = scmp.ne.s32.totalorder %s94, %s96
    %p103 = scmp.eq.s32.totalorder %s19, 3
    %p104 = por %p102, %p103
    %p105 = scmp.ne.s32.totalorder %s96, %s97
    %p106 = scmp.eq.s32.totalorder %s19, 0
    %p107 = por %p105, %p106
    %p108 = scmp.ne.s32.totalorder %s96, %s97
    %p109 = scmp.eq.s32.totalorder %s20, 3
    %p110 = por %p108, %p109
    %p112 = scmp.ne.s32.totalorder %s97, %s111
    %p113 = scmp.eq.s32.totalorder %s20, 0
    %p114 = por %p112, %p113
    %s116 = sadd.s32 %s115, 1
    %p119 = scmp.eq.s32.totalorder %s14, 3
    %p120 = scmp.ne.s32.totalorder %s115, %s117
    %p121 = scmp.eq.s32.totalorder %s14, 0
    %p122 = por %p120, %p121
    %p123 = scmp.ne.s32.totalorder %s115, %s117
    %p124 = scmp.eq.s32.totalorder %s19, 3
    %p125 = por %p123, %p124
    %p126 = scmp.ne.s32.totalorder %s117, %s118
    %p127 = scmp.eq.s32.totalorder %s19, 0
    %p128 = por %p126, %p127
    %p129 = scmp.ne.s32.totalorder %s117, %s118
    %p130 = scmp.eq.s32.totalorder %s20, 3
    %p131 = por %p129, %p130
    %p133 = scmp.ne.s32.totalorder %s118, %s132
    %p134 = scmp.eq.s32.totalorder %s20, 0
    %p135 = por %p133, %p134
    %s137 = sadd.s32 %s136, 1
    %p140 = scmp.eq.s32.totalorder %s14, 3
    %p141 = scmp.ne.s32.totalorder %s136, %s138
    %p142 = scmp.eq.s32.totalorder %s14, 0
    %p143 = por %p141, %p142
    %p144 = scmp.ne.s32.totalorder %s136, %s138
    %p145 = scmp.eq.s32.totalorder %s19, 3
    %p146 = por %p144, %p145
    %p147 = scmp.ne.s32.totalorder %s138, %s139
    %p148 = scmp.eq.s32.totalorder %s19, 0
    %p149 = por %p147, %p148
    %p150 = scmp.ne.s32.totalorder %s138, %s139
    %p151 = scmp.eq.s32.totalorder %s20, 3
    %p152 = por %p150, %p151
    %p154 = scmp.ne.s32.totalorder %s139, %s153
    %p155 = scmp.eq.s32.totalorder %s20, 0
    %p156 = por %p154, %p155
    %s158 = sadd.s32 %s157, 1
    %p161 = scmp.eq.s32.totalorder %s14, 3
    %p162 = scmp.ne.s32.totalorder %s157, %s159
    %p163 = scmp.eq.s32.totalorder %s14, 0
    %p164 = por %p162, %p163
    %p165 = scmp.ne.s32.totalorder %s157, %s159
    %p166 = scmp.eq.s32.totalorder %s19, 3
    %p167 = por %p165, %p166
    %p168 = scmp.ne.s32.totalorder %s159, %s160
    %p169 = scmp.eq.s32.totalorder %s19, 0
    %p170 = por %p168, %p169
    %p171 = scmp.ne.s32.totalorder %s159, %s160
    %p172 = scmp.eq.s32.totalorder %s20, 3
    %p173 = por %p171, %p172
    %p175 = scmp.ne.s32.totalorder %s160, %s174
    %p176 = scmp.eq.s32.totalorder %s20, 0
    %p177 = por %p175, %p176
    %s179 = sadd.s32 %s178, 1
    %p182 = scmp.eq.s32.totalorder %s14, 3
    %p183 = scmp.ne.s32.totalorder %s178, %s180
    %p184 = scmp.eq.s32.totalorder %s14, 0
    %p185 = por %p183, %p184
    %p186 = scmp.ne.s32.totalorder %s178, %s180
    %p187 = scmp.eq.s32.totalorder %s19, 3
    %p188 = por %p186, %p187
    %p189 = scmp.ne.s32.totalorder %s180, %s181
    %p190 = scmp.eq.s32.totalorder %s19, 0
    %p191 = por %p189, %p190
    %p192 = scmp.ne.s32.totalorder %s180, %s181
    %p193 = scmp.eq.s32.totalorder %s20, 3
    %p194 = por %p192, %p193
    %p196 = scmp.ne.s32.totalorder %s181, %s195
    %p197 = scmp.eq.s32.totalorder %s20, 0
    %p198 = por %p196, %p197
    %s200 = sadd.s32 %s199, 1
    %p203 = scmp.eq.s32.totalorder %s14, 3
    %p204 = scmp.ne.s32.totalorder %s199, %s201
    %p205 = scmp.eq.s32.totalorder %s14, 0
    %p206 = por %p204, %p205
    %p207 = scmp.ne.s32.totalorder %s199, %s201
    %p208 = scmp.eq.s32.totalorder %s19, 3
    %p209 = por %p207, %p208
    %p210 = scmp.ne.s32.totalorder %s201, %s202
    %p211 = scmp.eq.s32.totalorder %s19, 0
    %p212 = por %p210, %p211
    %p213 = scmp.ne.s32.totalorder %s201, %s202
    %p214 = scmp.eq.s32.totalorder %s20, 3
    %p215 = por %p213, %p214
    %p217 = scmp.ne.s32.totalorder %s202, %s216
    %p218 = scmp.eq.s32.totalorder %s20, 0
    %p219 = por %p217, %p218
    %s220 = smul.u32 %s21, 2
    %s221 = sadd.s32 %s220, %s22
    %s222 = smul.u32 %s33, 2
    %s223 = sadd.s32 %s222, %s29
    %s224 = ssub.s32 %s221, %s223
    %p225 = scmp.eq.s32.totalorder %s224, 0
    %s227 = sadd.s32 %s226, 1
    %s228 = scalar_select %p225, %s226, %s227
    %p231 = pneg %p225
    %p232 = scmp.eq.s32.totalorder %s14, 3
    %p233 = por %p231, %p232
    %p234 = scmp.ne.s32.totalorder %s226, %s229
    %p235 = scmp.eq.s32.totalorder %s14, 0
    %p236 = por %p234, %p235
    %p237 = scmp.ne.s32.totalorder %s226, %s229
    %p238 = scmp.eq.s32.totalorder %s19, 3
    %p239 = por %p237, %p238
    %p240 = scmp.ne.s32.totalorder %s229, %s230
    %p241 = scmp.eq.s32.totalorder %s19, 0
    %p242 = por %p240, %p241
    %p243 = scmp.ne.s32.totalorder %s229, %s230
    %p244 = scmp.eq.s32.totalorder %s20, 3
    %p245 = por %p243, %p244
    %p247 = scmp.ne.s32.totalorder %s230, %s246
    %p248 = scmp.eq.s32.totalorder %s20, 0
    %p249 = por %p247, %p248
    %p250 = scmp.le.s32.totalorder 1, %s14
    %p251 = scmp.lt.s32.totalorder %s14, 5
    %p252 = pnand %p250, %p251
    %p253 = pneg %p252
    // Predicated region
    $region9: #{tpu_custom_call.1} parent=5 // pred_check
      _
    $region10: #{tpu_custom_call.1} parent=5 // pred_check_branch
      %255 = sbr.rel (%p252) target = $region12
    $region11: #{tpu_custom_call.1} parent=5 // pred_region
      %s256 = ssub.s32 %s14, 1
      // Predicated region
      $region13: #{tpu_custom_call.1} parent=11 // pred_check
        %p257 = pneg %p107
      $region14: #{tpu_custom_call.1} parent=11 // pred_check_branch
        %259 = sbr.rel (%p257) target = $region16
      $region15: #{tpu_custom_call.1} parent=11 // pred_region
        _
      $region16: #{tpu_custom_call.1} parent=11 // pred_fallthru
        _
      // Predicated region
      $region17: #{tpu_custom_call.1} parent=11 // pred_check
        %p260 = pneg %p128
      $region18: #{tpu_custom_call.1} parent=11 // pred_check_branch
        %262 = sbr.rel (%p260) target = $region20
      $region19: #{tpu_custom_call.1} parent=11 // pred_region
        _
      $region20: #{tpu_custom_call.1} parent=11 // pred_fallthru
        _
      // Predicated region
      $region21: #{tpu_custom_call.1} parent=11 // pred_check
        %p263 = pneg %p149
      $region22: #{tpu_custom_call.1} parent=11 // pred_check_branch
        %265 = sbr.rel (%p263) target = $region24
      $region23: #{tpu_custom_call.1} parent=11 // pred_region
        _
      $region24: #{tpu_custom_call.1} parent=11 // pred_fallthru
        _
      // Predicated region
      $region25: #{tpu_custom_call.1} parent=11 // pred_check
        %p266 = pneg %p170
      $region26: #{tpu_custom_call.1} parent=11 // pred_check_branch
        %268 = sbr.rel (%p266) target = $region28
      $region27: #{tpu_custom_call.1} parent=11 // pred_region
        _
      $region28: #{tpu_custom_call.1} parent=11 // pred_fallthru
        _
      // Predicated region
      $region29: #{tpu_custom_call.1} parent=11 // pred_check
        %p269 = pneg %p191
      $region30: #{tpu_custom_call.1} parent=11 // pred_check_branch
        %271 = sbr.rel (%p269) target = $region32
      $region31: #{tpu_custom_call.1} parent=11 // pred_region
        _
      $region32: #{tpu_custom_call.1} parent=11 // pred_fallthru
        _
      // Predicated region
      $region33: #{tpu_custom_call.1} parent=11 // pred_check
        %p272 = pneg %p212
      $region34: #{tpu_custom_call.1} parent=11 // pred_check_branch
        %274 = sbr.rel (%p272) target = $region36
      $region35: #{tpu_custom_call.1} parent=11 // pred_region
        _
      $region36: #{tpu_custom_call.1} parent=11 // pred_fallthru
        _
    $region12: #{tpu_custom_call.1} parent=5 // pred_fallthru
      _
    %p275 = scmp.lt.s32.totalorder %s14, 4
    // Predicated region
    $region37: #{tpu_custom_call.1} parent=5 // pred_check
      %p276 = pneg %p275
    $region38: #{tpu_custom_call.1} parent=5 // pred_check_branch
      %278 = sbr.rel (%p276) target = $region40
    $region39: #{tpu_custom_call.1} parent=5 // pred_region
      // Predicated region
      $region41: #{tpu_custom_call.1} parent=39 // pred_check
        %p279 = pneg %p50
      $region42: #{tpu_custom_call.1} parent=39 // pred_check_branch
        %281 = sbr.rel (%p279) target = $region44
      $region43: #{tpu_custom_call.1} parent=39 // pred_region
        %s282 = smul.u32 %s21, 2
        %s283 = sadd.s32 %s282, %s22
        %p284 = scmp.lt.s32.totalorder %s283, 3
        %s285 = scalar_select %p284, %s283, 3
        %s286 = smul.addr %s285, 42
        %s287 = smul.addr %s286, 4
        %s288 = scalar_lea.vmem %s0, %s287
        %s289 = smul.u32 %s21, 2
        %s290 = sadd.s32 %s289, %s22
      $region44: #{tpu_custom_call.1} parent=39 // pred_fallthru
        _
      // Predicated region
      $region45: #{tpu_custom_call.1} parent=39 // pred_check
        %p291 = pneg %p80
      $region46: #{tpu_custom_call.1} parent=39 // pred_check_branch
        %293 = sbr.rel (%p291) target = $region48
      $region47: #{tpu_custom_call.1} parent=39 // pred_region
        %s294 = smul.u32 %s21, 2
        %s295 = sadd.s32 %s294, %s22
        %p296 = scmp.lt.s32.totalorder %s295, 3
        %s297 = scalar_select %p296, %s295, 3
        %s298 = smul.addr %s297, 16
        %s299 = smul.addr %s298, 8
        %s300 = scalar_lea.vmem %s1, %s299
        %s301 = smul.u32 %s21, 2
        %s302 = sadd.s32 %s301, %s22
      $region48: #{tpu_custom_call.1} parent=39 // pred_fallthru
        _
    $region40: #{tpu_custom_call.1} parent=5 // pred_fallthru
      _
    %p303 = scmp.le.s32.totalorder 1, %s14
    %p304 = scmp.lt.s32.totalorder %s14, 5
    %p305 = pnand %p303, %p304
    %p306 = pneg %p305
    // Predicated region
    $region49: #{tpu_custom_call.1} parent=5 // pred_check
      _
    $region50: #{tpu_custom_call.1} parent=5 // pred_check_branch
      %308 = sbr.rel (%p305) target = $region52
    $region51: #{tpu_custom_call.1} parent=5 // pred_region
      %s309 = ssub.s32 %s14, 1
      %s310 = smul.u32 %s23, 2
      %s311 = sadd.s32 %s310, %s24
      %p312 = scmp.lt.s32.totalorder %s311, 3
      %s313 = scalar_select %p312, %s311, 3
      %s314 = smul.addr %s313, 42
      %s315 = smul.addr %s314, 4
      %s316 = scalar_lea.vmem %s0, %s315
      %p317 = pneg %p56
      %p318 = pneg %p53
      %s319 = smul.u32 %s23, 2
      %s320 = sadd.s32 %s319, %s24
      %p321 = scmp.lt.s32.totalorder %s320, 3
      %s322 = scalar_select %p321, %s320, 3
      %s323 = smul.addr %s322, 16
      %s324 = smul.addr %s323, 8
      %s325 = scalar_lea.vmem %s1, %s324
      %p326 = pneg %p86
      %p327 = pneg %p83
      %p328 = pneg %p107
      %p329 = pneg %p104
      %p330 = pneg %p128
      %p331 = pneg %p125
      %p332 = pneg %p149
      %p333 = pneg %p146
      %p334 = pneg %p170
      %p335 = pneg %p167
      %p336 = pneg %p191
      %p337 = pneg %p188
      %p338 = pneg %p212
      %p339 = pneg %p209
      %p340 = pneg %p242
      %p341 = pneg %p239
      %s342 = smul.u32 %s23, 2
      %s343 = sadd.s32 %s342, %s24
      %p344 = scmp.lt.s32.totalorder %s343, 3
      %s345 = scalar_select %p344, %s343, 3
      %s346 = smul.addr %s345, 16
      %s347 = smul.addr %s346, 8
      %s348 = scalar_lea.vmem %s8, %s347
      %s349 = smul.u32 %s23, 2
      %s350 = sadd.s32 %s349, %s24
      %p351 = scmp.lt.s32.totalorder %s350, 3
      %s352 = scalar_select %p351, %s350, 3
      %s353 = smul.addr %s352, 42
      %s354 = smul.addr %s353, 4
      %s355 = scalar_lea.vmem %s0, %s354
      %s356 = smul.u32 %s23, 2
      %s357 = sadd.s32 %s356, %s24
      %s358 = smul.u32 %s23, 2
      %s359 = sadd.s32 %s358, %s24
      %p360 = scmp.lt.s32.totalorder %s359, 3
      %s361 = scalar_select %p360, %s359, 3
      %s362 = smul.addr %s361, 16
      %s363 = smul.addr %s362, 8
      %s364 = scalar_lea.vmem %s1, %s363
      %s365 = smul.u32 %s23, 2
      %s366 = sadd.s32 %s365, %s24
      %s367 = smul.u32 %s23, 2
      %s368 = sadd.s32 %s367, %s24
      %p369 = scmp.lt.s32.totalorder %s368, 3
      %s370 = scalar_select %p369, %s368, 3
      %s371 = smul.addr %s370, 16
      %s372 = smul.addr %s371, 8
      %s373 = scalar_lea.vmem %s8, %s372
      %s374 = smul.u32 %s23, 2
      %s375 = sadd.s32 %s374, %s24
      %v377 = vld [vmem:[%s355] sm:$0xf]
      %v378 = vld [vmem:[%s355 + $0x4] sm:$0xf]
      %v379 = vld [vmem:[%s355 + $0x8] sm:$0x3]
      %v380 = vld [vmem:[%s355 + $0xc] sm:$0xf]
      %v381 = vld [vmem:[%s355 + $0x10] sm:$0xf]
      %v382 = vld [vmem:[%s355 + $0x14] sm:$0x3]
      %v383 = vld [vmem:[%s355 + $0x18] sm:$0xf]
      %v384 = vld [vmem:[%s355 + $0x1c] sm:$0xf]
      %v385 = vld [vmem:[%s355 + $0x20] sm:$0x3]
      %v386 = vld [vmem:[%s355 + $0x24] sm:$0xf]
      %v387 = vld [vmem:[%s355 + $0x28] sm:$0xf]
      %v388 = vld [vmem:[%s355 + $0x2c] sm:$0x3]
      %v389 = vld [vmem:[%s355 + $0x30] sm:$0xf]
      %v390 = vld [vmem:[%s355 + $0x34] sm:$0xf]
      %v391 = vld [vmem:[%s355 + $0x38] sm:$0x3]
      %v392 = vld [vmem:[%s355 + $0x3c] sm:$0xf]
      %v393 = vld [vmem:[%s355 + $0x40] sm:$0xf]
      %v394 = vld [vmem:[%s355 + $0x44] sm:$0x3]
      %v395 = vld [vmem:[%s355 + $0x48] sm:$0xf]
      %v396 = vld [vmem:[%s355 + $0x4c] sm:$0xf]
      %v397 = vld [vmem:[%s355 + $0x50] sm:$0x3]
      %v398 = vld [vmem:[%s355 + $0x54] sm:$0xf]
      %v399 = vld [vmem:[%s355 + $0x58] sm:$0xf]
      %v400 = vld [vmem:[%s355 + $0x5c] sm:$0x3]
      %v401 = vld [vmem:[%s355 + $0x60] sm:$0xf]
      %v402 = vld [vmem:[%s355 + $0x64] sm:$0xf]
      %v403 = vld [vmem:[%s355 + $0x68] sm:$0x3]
      %v404 = vld [vmem:[%s355 + $0x6c] sm:$0xf]
      %v405 = vld [vmem:[%s355 + $0x70] sm:$0xf]
      %v406 = vld [vmem:[%s355 + $0x74] sm:$0x3]
      %v407 = vld [vmem:[%s355 + $0x78] sm:$0xf]
      %v408 = vld [vmem:[%s355 + $0x7c] sm:$0xf]
      %v409 = vld [vmem:[%s355 + $0x80] sm:$0x3]
      %v410 = vld [vmem:[%s355 + $0x84] sm:$0xf]
      %v411 = vld [vmem:[%s355 + $0x88] sm:$0xf]
      %v412 = vld [vmem:[%s355 + $0x8c] sm:$0x3]
      %v413 = vld [vmem:[%s355 + $0x90] sm:$0xf]
      %v414 = vld [vmem:[%s355 + $0x94] sm:$0xf]
      %v415 = vld [vmem:[%s355 + $0x98] sm:$0x3]
      %v416 = vld [vmem:[%s355 + $0x9c] sm:$0xf]
      %v417 = vld [vmem:[%s355 + $0xa0] sm:$0xf]
      %v418 = vld [vmem:[%s355 + $0xa4] sm:$0x3]
      %vm419 = vsmask.f32 3328
      %vm420 = vsmask.f32 7440
      %vm421 = vmor %vm419, %vm420
      %v423 = vshrl.u32 %v380, 16
      %v425 = vrot.slane %v423, 4
      %v426 = vshll.u32 %v380, 16
      %v428 = vrot.slane %v426, 5
      %v429 = vor.u32 %v425, %v428
      %v430 = vrot.slane %v429, 4
      %v432 = vshll.u32 %v381, 16
      %v434 = vrot.slane %v432, 5
      %v435 = vsel %vm421, %v430, %v434
      %v436 = vshrl.u32 %v381, 16
      %v438 = vrot.slane %v436, 4
      %v439 = vor.u32 %v438, %v434
      %v440 = vrot.slane %v439, 4
      %v442 = vshll.u32 %v382, 16
      %v444 = vrot.slane %v442, 5
      %v445 = vsel %vm421, %v440, %v444
      %v447 = vshrl.u32 %v383, 16
      %v449 = vrot.slane %v447, 4
      %v450 = vshll.u32 %v383, 16
      %v452 = vrot.slane %v450, 5
      %v453 = vor.u32 %v449, %v452
      %v454 = vrot.slane %v453, 4
      %v456 = vshll.u32 %v384, 16
      %v458 = vrot.slane %v456, 5
      %v459 = vsel %vm421, %v454, %v458
      %v460 = vshrl.u32 %v384, 16
      %v462 = vrot.slane %v460, 4
      %v463 = vor.u32 %v462, %v458
      %v464 = vrot.slane %v463, 4
      %v466 = vshll.u32 %v385, 16
      %v468 = vrot.slane %v466, 5
      %v469 = vsel %vm421, %v464, %v468
      %v471 = vshrl.u32 %v386, 16
      %v473 = vrot.slane %v471, 4
      %v474 = vshll.u32 %v386, 16
      %v476 = vrot.slane %v474, 5
      %v477 = vor.u32 %v473, %v476
      %v478 = vrot.slane %v477, 4
      %v480 = vshll.u32 %v387, 16
      %v482 = vrot.slane %v480, 5
      %v483 = vsel %vm421, %v478, %v482
      %v484 = vshrl.u32 %v387, 16
      %v486 = vrot.slane %v484, 4
      %v487 = vor.u32 %v486, %v482
      %v488 = vrot.slane %v487, 4
      %v490 = vshll.u32 %v388, 16
      %v492 = vrot.slane %v490, 5
      %v493 = vsel %vm421, %v488, %v492
      %v495 = vshrl.u32 %v389, 16
      %v497 = vrot.slane %v495, 4
      %v498 = vshll.u32 %v389, 16
      %v500 = vrot.slane %v498, 5
      %v501 = vor.u32 %v497, %v500
      %v502 = vrot.slane %v501, 4
      %v504 = vshll.u32 %v390, 16
      %v506 = vrot.slane %v504, 5
      %v507 = vsel %vm421, %v502, %v506
      %v508 = vshrl.u32 %v390, 16
      %v510 = vrot.slane %v508, 4
      %v511 = vor.u32 %v510, %v506
      %v512 = vrot.slane %v511, 4
      %v514 = vshll.u32 %v391, 16
      %v516 = vrot.slane %v514, 5
      %v517 = vsel %vm421, %v512, %v516
      %v519 = vshrl.u32 %v392, 16
      %v521 = vrot.slane %v519, 4
      %v522 = vshll.u32 %v392, 16
      %v524 = vrot.slane %v522, 5
      %v525 = vor.u32 %v521, %v524
      %v526 = vrot.slane %v525, 4
      %v528 = vshll.u32 %v393, 16
      %v530 = vrot.slane %v528, 5
      %v531 = vsel %vm421, %v526, %v530
      %v532 = vshrl.u32 %v393, 16
      %v534 = vrot.slane %v532, 4
      %v535 = vor.u32 %v534, %v530
      %v536 = vrot.slane %v535, 4
      %v538 = vshll.u32 %v394, 16
      %v540 = vrot.slane %v538, 5
      %v541 = vsel %vm421, %v536, %v540
      %v543 = vshrl.u32 %v395, 16
      %v545 = vrot.slane %v543, 4
      %v546 = vshll.u32 %v395, 16
      %v548 = vrot.slane %v546, 5
      %v549 = vor.u32 %v545, %v548
      %v550 = vrot.slane %v549, 4
      %v552 = vshll.u32 %v396, 16
      %v554 = vrot.slane %v552, 5
      %v555 = vsel %vm421, %v550, %v554
      %v556 = vshrl.u32 %v396, 16
      %v558 = vrot.slane %v556, 4
      %v559 = vor.u32 %v558, %v554
      %v560 = vrot.slane %v559, 4
      %v562 = vshll.u32 %v397, 16
      %v564 = vrot.slane %v562, 5
      %v565 = vsel %vm421, %v560, %v564
      %v567 = vshrl.u32 %v398, 16
      %v569 = vrot.slane %v567, 4
      %v570 = vshll.u32 %v398, 16
      %v572 = vrot.slane %v570, 5
      %v573 = vor.u32 %v569, %v572
      %v574 = vrot.slane %v573, 4
      %v576 = vshll.u32 %v399, 16
      %v578 = vrot.slane %v576, 5
      %v579 = vsel %vm421, %v574, %v578
      %v580 = vshrl.u32 %v399, 16
      %v582 = vrot.slane %v580, 4
      %v583 = vor.u32 %v582, %v578
      %v584 = vrot.slane %v583, 4
      %v586 = vshll.u32 %v400, 16
      %v588 = vrot.slane %v586, 5
      %v589 = vsel %vm421, %v584, %v588
      %v591 = vshrl.u32 %v401, 16
      %v593 = vrot.slane %v591, 4
      %v594 = vshll.u32 %v401, 16
      %v596 = vrot.slane %v594, 5
      %v597 = vor.u32 %v593, %v596
      %v598 = vrot.slane %v597, 4
      %v600 = vshll.u32 %v402, 16
      %v602 = vrot.slane %v600, 5
      %v603 = vsel %vm421, %v598, %v602
      %v604 = vshrl.u32 %v402, 16
      %v606 = vrot.slane %v604, 4
      %v607 = vor.u32 %v606, %v602
      %v608 = vrot.slane %v607, 4
      %v610 = vshll.u32 %v403, 16
      %v612 = vrot.slane %v610, 5
      %v613 = vsel %vm421, %v608, %v612
      %v615 = vshrl.u32 %v404, 16
      %v617 = vrot.slane %v615, 4
      %v618 = vshll.u32 %v404, 16
      %v620 = vrot.slane %v618, 5
      %v621 = vor.u32 %v617, %v620
      %v622 = vrot.slane %v621, 4
      %v624 = vshll.u32 %v405, 16
      %v626 = vrot.slane %v624, 5
      %v627 = vsel %vm421, %v622, %v626
      %v628 = vshrl.u32 %v405, 16
      %v630 = vrot.slane %v628, 4
      %v631 = vor.u32 %v630, %v626
      %v632 = vrot.slane %v631, 4
      %v634 = vshll.u32 %v406, 16
      %v636 = vrot.slane %v634, 5
      %v637 = vsel %vm421, %v632, %v636
      %v639 = vshrl.u32 %v407, 16
      %v641 = vrot.slane %v639, 4
      %v642 = vshll.u32 %v407, 16
      %v644 = vrot.slane %v642, 5
      %v645 = vor.u32 %v641, %v644
      %v646 = vrot.slane %v645, 4
      %v648 = vshll.u32 %v408, 16
      %v650 = vrot.slane %v648, 5
      %v651 = vsel %vm421, %v646, %v650
      %v652 = vshrl.u32 %v408, 16
      %v654 = vrot.slane %v652, 4
      %v655 = vor.u32 %v654, %v650
      %v656 = vrot.slane %v655, 4
      %v658 = vshll.u32 %v409, 16
      %v660 = vrot.slane %v658, 5
      %v661 = vsel %vm421, %v656, %v660
      %v663 = vshrl.u32 %v410, 16
      %v665 = vrot.slane %v663, 4
      %v666 = vshll.u32 %v410, 16
      %v668 = vrot.slane %v666, 5
      %v669 = vor.u32 %v665, %v668
      %v670 = vrot.slane %v669, 4
      %v672 = vshll.u32 %v411, 16
      %v674 = vrot.slane %v672, 5
      %v675 = vsel %vm421, %v670, %v674
      %v676 = vshrl.u32 %v411, 16
      %v678 = vrot.slane %v676, 4
      %v679 = vor.u32 %v678, %v674
      %v680 = vrot.slane %v679, 4
      %v682 = vshll.u32 %v412, 16
      %v684 = vrot.slane %v682, 5
      %v685 = vsel %vm421, %v680, %v684
      %v687 = vshrl.u32 %v413, 16
      %v689 = vrot.slane %v687, 4
      %v690 = vshll.u32 %v413, 16
      %v692 = vrot.slane %v690, 5
      %v693 = vor.u32 %v689, %v692
      %v694 = vrot.slane %v693, 4
      %v696 = vshll.u32 %v414, 16
      %v698 = vrot.slane %v696, 5
      %v699 = vsel %vm421, %v694, %v698
      %v700 = vshrl.u32 %v414, 16
      %v702 = vrot.slane %v700, 4
      %v703 = vor.u32 %v702, %v698
      %v704 = vrot.slane %v703, 4
      %v706 = vshll.u32 %v415, 16
      %v708 = vrot.slane %v706, 5
      %v709 = vsel %vm421, %v704, %v708
      %vm740 = vcmask 1042432
      %vm741 = vcmask 1046532
      %vm742 = vmor %vm740, %vm741
      %v743 = vrot.slane %v380, 5
      %v744 = vrot.slane %v743, 4
      %v745 = vrot.slane %v381, 5
      %v746 = vsel %vm742, %v744, %v745
      %v747 = vrot.slane %v745, 4
      %v748 = vrot.slane %v382, 5
      %v749 = vsel %vm742, %v747, %v748
      %v750 = vrot.slane %v383, 5
      %v751 = vrot.slane %v750, 4
      %v752 = vrot.slane %v384, 5
      %v753 = vsel %vm742, %v751, %v752
      %v754 = vrot.slane %v752, 4
      %v755 = vrot.slane %v385, 5
      %v756 = vsel %vm742, %v754, %v755
      %v757 = vrot.slane %v386, 5
      %v758 = vrot.slane %v757, 4
      %v759 = vrot.slane %v387, 5
      %v760 = vsel %vm742, %v758, %v759
      %v761 = vrot.slane %v759, 4
      %v762 = vrot.slane %v388, 5
      %v763 = vsel %vm742, %v761, %v762
      %v764 = vrot.slane %v389, 5
      %v765 = vrot.slane %v764, 4
      %v766 = vrot.slane %v390, 5
      %v767 = vsel %vm742, %v765, %v766
      %v768 = vrot.slane %v766, 4
      %v769 = vrot.slane %v391, 5
      %v770 = vsel %vm742, %v768, %v769
      %v771 = vrot.slane %v392, 5
      %v772 = vrot.slane %v771, 4
      %v773 = vrot.slane %v393, 5
      %v774 = vsel %vm742, %v772, %v773
      %v775 = vrot.slane %v773, 4
      %v776 = vrot.slane %v394, 5
      %v777 = vsel %vm742, %v775, %v776
      %v778 = vrot.slane %v395, 5
      %v779 = vrot.slane %v778, 4
      %v780 = vrot.slane %v396, 5
      %v781 = vsel %vm742, %v779, %v780
      %v782 = vrot.slane %v780, 4
      %v783 = vrot.slane %v397, 5
      %v784 = vsel %vm742, %v782, %v783
      %v785 = vrot.slane %v398, 5
      %v786 = vrot.slane %v785, 4
      %v787 = vrot.slane %v399, 5
      %v788 = vsel %vm742, %v786, %v787
      %v789 = vrot.slane %v787, 4
      %v790 = vrot.slane %v400, 5
      %v791 = vsel %vm742, %v789, %v790
      %v792 = vrot.slane %v401, 5
      %v793 = vrot.slane %v792, 4
      %v794 = vrot.slane %v402, 5
      %v795 = vsel %vm742, %v793, %v794
      %v796 = vrot.slane %v794, 4
      %v797 = vrot.slane %v403, 5
      %v798 = vsel %vm742, %v796, %v797
      %v799 = vrot.slane %v404, 5
      %v800 = vrot.slane %v799, 4
      %v801 = vrot.slane %v405, 5
      %v802 = vsel %vm742, %v800, %v801
      %v803 = vrot.slane %v801, 4
      %v804 = vrot.slane %v406, 5
      %v805 = vsel %vm742, %v803, %v804
      %v806 = vrot.slane %v407, 5
      %v807 = vrot.slane %v806, 4
      %v808 = vrot.slane %v408, 5
      %v809 = vsel %vm742, %v807, %v808
      %v810 = vrot.slane %v808, 4
      %v811 = vrot.slane %v409, 5
      %v812 = vsel %vm742, %v810, %v811
      %v816 = vrot.slane %v410, 5
      %v817 = vrot.slane %v816, 4
      %v818 = vrot.slane %v411, 5
      %v819 = vsel %vm742, %v817, %v818
      %v820 = vrot.slane %v818, 4
      %v821 = vrot.slane %v412, 5
      %v822 = vsel %vm742, %v820, %v821
      %v826 = vrot.slane %v413, 5
      %v827 = vrot.slane %v826, 4
      %v828 = vrot.slane %v414, 5
      %v829 = vsel %vm742, %v827, %v828
      %v830 = vrot.slane %v828, 4
      %v831 = vrot.slane %v415, 5
      %v832 = vsel %vm742, %v830, %v831
      %vm833 = vsmask.f32 2304
      %vm834 = vsmask.f32 6416
      %vm835 = vmor %vm833, %vm834
      %v836 = vrot.slane %v423, 5
      %v837 = vrot.slane %v426, 6
      %v838 = vor.u32 %v836, %v837
      %v839 = vrot.slane %v838, 4
      %v840 = vrot.slane %v436, 5
      %v841 = vrot.slane %v432, 6
      %v842 = vor.u32 %v840, %v841
      %v843 = vsel %vm835, %v839, %v842
      %v844 = vrot.slane %v842, 4
      %v845 = vshrl.u32 %v382, 16
      %v847 = vrot.slane %v845, 5
      %v848 = vrot.slane %v442, 6
      %v849 = vor.u32 %v847, %v848
      %v850 = vsel %vm835, %v844, %v849
      %v851 = vrot.slane %v447, 5
      %v852 = vrot.slane %v450, 6
      %v853 = vor.u32 %v851, %v852
      %v854 = vrot.slane %v853, 4
      %v855 = vrot.slane %v460, 5
      %v856 = vrot.slane %v456, 6
      %v857 = vor.u32 %v855, %v856
      %v858 = vsel %vm835, %v854, %v857
      %v859 = vrot.slane %v857, 4
      %v860 = vshrl.u32 %v385, 16
      %v862 = vrot.slane %v860, 5
      %v863 = vrot.slane %v466, 6
      %v864 = vor.u32 %v862, %v863
      %v865 = vsel %vm835, %v859, %v864
      %v866 = vrot.slane %v471, 5
      %v867 = vrot.slane %v474, 6
      %v868 = vor.u32 %v866, %v867
      %v869 = vrot.slane %v868, 4
      %v870 = vrot.slane %v484, 5
      %v871 = vrot.slane %v480, 6
      %v872 = vor.u32 %v870, %v871
      %v873 = vsel %vm835, %v869, %v872
      %v874 = vrot.slane %v872, 4
      %v875 = vshrl.u32 %v388, 16
      %v877 = vrot.slane %v875, 5
      %v878 = vrot.slane %v490, 6
      %v879 = vor.u32 %v877, %v878
      %v880 = vsel %vm835, %v874, %v879
      %v881 = vrot.slane %v495, 5
      %v882 = vrot.slane %v498, 6
      %v883 = vor.u32 %v881, %v882
      %v884 = vrot.slane %v883, 4
      %v885 = vrot.slane %v508, 5
      %v886 = vrot.slane %v504, 6
      %v887 = vor.u32 %v885, %v886
      %v888 = vsel %vm835, %v884, %v887
      %v889 = vrot.slane %v887, 4
      %v890 = vshrl.u32 %v391, 16
      %v892 = vrot.slane %v890, 5
      %v893 = vrot.slane %v514, 6
      %v894 = vor.u32 %v892, %v893
      %v895 = vsel %vm835, %v889, %v894
      %v896 = vrot.slane %v519, 5
      %v897 = vrot.slane %v522, 6
      %v898 = vor.u32 %v896, %v897
      %v899 = vrot.slane %v898, 4
      %v900 = vrot.slane %v532, 5
      %v901 = vrot.slane %v528, 6
      %v902 = vor.u32 %v900, %v901
      %v903 = vsel %vm835, %v899, %v902
      %v904 = vrot.slane %v902, 4
      %v905 = vshrl.u32 %v394, 16
      %v907 = vrot.slane %v905, 5
      %v908 = vrot.slane %v538, 6
      %v909 = vor.u32 %v907, %v908
      %v910 = vsel %vm835, %v904, %v909
      %v911 = vrot.slane %v543, 5
      %v912 = vrot.slane %v546, 6
      %v913 = vor.u32 %v911, %v912
      %v914 = vrot.slane %v913, 4
      %v915 = vrot.slane %v556, 5
      %v916 = vrot.slane %v552, 6
      %v917 = vor.u32 %v915, %v916
      %v918 = vsel %vm835, %v914, %v917
      %v919 = vrot.slane %v917, 4
      %v920 = vshrl.u32 %v397, 16
      %v922 = vrot.slane %v920, 5
      %v923 = vrot.slane %v562, 6
      %v924 = vor.u32 %v922, %v923
      %v925 = vsel %vm835, %v919, %v924
      %v926 = vrot.slane %v567, 5
      %v927 = vrot.slane %v570, 6
      %v928 = vor.u32 %v926, %v927
      %v929 = vrot.slane %v928, 4
      %v930 = vrot.slane %v580, 5
      %v931 = vrot.slane %v576, 6
      %v932 = vor.u32 %v930, %v931
      %v933 = vsel %vm835, %v929, %v932
      %v934 = vrot.slane %v932, 4
      %v935 = vshrl.u32 %v400, 16
      %v937 = vrot.slane %v935, 5
      %v938 = vrot.slane %v586, 6
      %v939 = vor.u32 %v937, %v938
      %v940 = vsel %vm835, %v934, %v939
      %v941 = vrot.slane %v591, 5
      %v942 = vrot.slane %v594, 6
      %v943 = vor.u32 %v941, %v942
      %v944 = vrot.slane %v943, 4
      %v945 = vrot.slane %v604, 5
      %v946 = vrot.slane %v600, 6
      %v947 = vor.u32 %v945, %v946
      %v948 = vsel %vm835, %v944, %v947
      %v949 = vrot.slane %v947, 4
      %v950 = vshrl.u32 %v403, 16
      %v952 = vrot.slane %v950, 5
      %v953 = vrot.slane %v610, 6
      %v954 = vor.u32 %v952, %v953
      %v955 = vsel %vm835, %v949, %v954
      %v956 = vrot.slane %v615, 5
      %v957 = vrot.slane %v618, 6
      %v958 = vor.u32 %v956, %v957
      %v959 = vrot.slane %v958, 4
      %v960 = vrot.slane %v628, 5
      %v961 = vrot.slane %v624, 6
      %v962 = vor.u32 %v960, %v961
      %v963 = vsel %vm835, %v959, %v962
      %v964 = vrot.slane %v962, 4
      %v965 = vshrl.u32 %v406, 16
      %v967 = vrot.slane %v965, 5
      %v968 = vrot.slane %v634, 6
      %v969 = vor.u32 %v967, %v968
      %v970 = vsel %vm835, %v964, %v969
      %v971 = vrot.slane %v639, 5
      %v972 = vrot.slane %v642, 6
      %v973 = vor.u32 %v971, %v972
      %v974 = vrot.slane %v973, 4
      %v975 = vrot.slane %v652, 5
      %v976 = vrot.slane %v648, 6
      %v977 = vor.u32 %v975, %v976
      %v978 = vsel %vm835, %v974, %v977
      %v979 = vrot.slane %v977, 4
      %v980 = vshrl.u32 %v409, 16
      %v982 = vrot.slane %v980, 5
      %v983 = vrot.slane %v658, 6
      %v984 = vor.u32 %v982, %v983
      %v985 = vsel %vm835, %v979, %v984
      %v986 = vrot.slane %v663, 5
      %v987 = vrot.slane %v666, 6
      %v988 = vor.u32 %v986, %v987
      %v989 = vrot.slane %v988, 4
      %v990 = vrot.slane %v676, 5
      %v991 = vrot.slane %v672, 6
      %v992 = vor.u32 %v990, %v991
      %v993 = vsel %vm835, %v989, %v992
      %v994 = vrot.slane %v992, 4
      %v995 = vshrl.u32 %v412, 16
      %v997 = vrot.slane %v995, 5
      %v998 = vrot.slane %v682, 6
      %v999 = vor.u32 %v997, %v998
      %v1000 = vsel %vm835, %v994, %v999
      %v1001 = vrot.slane %v687, 5
      %v1002 = vrot.slane %v690, 6
      %v1003 = vor.u32 %v1001, %v1002
      %v1004 = vrot.slane %v1003, 4
      %v1005 = vrot.slane %v700, 5
      %v1006 = vrot.slane %v696, 6
      %v1007 = vor.u32 %v1005, %v1006
      %v1008 = vsel %vm835, %v1004, %v1007
      %v1009 = vrot.slane %v1007, 4
      %v1010 = vshrl.u32 %v415, 16
      %v1012 = vrot.slane %v1010, 5
      %v1013 = vrot.slane %v706, 6
      %v1014 = vor.u32 %v1012, %v1013
      %v1015 = vsel %vm835, %v1009, %v1014
      %v1016 = vunpack.c.l.b16 %v435
      %v1017 = vunpack.c.l.b16 %v445
      %v1018 = vunpack.c.l.b16 %v459
      %v1019 = vunpack.c.l.b16 %v469
      %v1020 = vunpack.c.l.b16 %v483
      %v1021 = vunpack.c.l.b16 %v493
      %v1022 = vunpack.c.l.b16 %v507
      %v1023 = vunpack.c.l.b16 %v517
      %v1024 = vunpack.c.l.b16 %v531
      %v1025 = vunpack.c.l.b16 %v541
      %v1026 = vunpack.c.l.b16 %v555
      %v1027 = vunpack.c.l.b16 %v565
      %v1028 = vunpack.c.l.b16 %v579
      %v1029 = vunpack.c.l.b16 %v589
      %v1030 = vunpack.c.l.b16 %v603
      %v1031 = vunpack.c.l.b16 %v613
      %v1032 = vunpack.c.l.b16 %v627
      %v1033 = vunpack.c.l.b16 %v637
      %v1034 = vunpack.c.l.b16 %v651
      %v1035 = vunpack.c.l.b16 %v661
      %v1036 = vpack.c.b16 %v1017, %v1016
      %v1037 = vpack.c.b16 %v1019, %v1018
      %v1038 = vpack.c.b16 %v1021, %v1020
      %v1039 = vpack.c.b16 %v1023, %v1022
      %v1040 = vpack.c.b16 %v1025, %v1024
      %v1041 = vpack.c.b16 %v1027, %v1026
      %v1042 = vpack.c.b16 %v1029, %v1028
      %v1043 = vpack.c.b16 %v1031, %v1030
      %v1044 = vpack.c.b16 %v1033, %v1032
      %v1045 = vpack.c.b16 %v1035, %v1034
      %v1046 = vunpack.c.l.b16 %v675
      %v1047 = vunpack.c.l.b16 %v685
      %v1048 = vpack.c.b16 %v1047, %v1046
      %1049 = vrot.lane.b32.xlu0 %v1037, 4
      %v1050 = vpop.permute.xlu0 %1049
      %1051 = vrot.lane.b32.xlu0 %v1038, 4
      %v1052 = vpop.permute.xlu0 %1051
      %1053 = vrot.lane.b32.xlu0 %v1039, 4
      %v1054 = vpop.permute.xlu0 %1053
      %1055 = vrot.lane.b32.xlu0 %v1040, 4
      %v1056 = vpop.permute.xlu0 %1055
      %1057 = vrot.lane.b32.xlu0 %v1041, 4
      %v1058 = vpop.permute.xlu0 %1057
      %1059 = vrot.lane.b32.xlu0 %v1042, 4
      %v1060 = vpop.permute.xlu0 %1059
      %1061 = vrot.lane.b32.xlu0 %v1043, 4
      %v1062 = vpop.permute.xlu0 %1061
      %1063 = vrot.lane.b32.xlu0 %v1044, 4
      %v1064 = vpop.permute.xlu0 %1063
      %1065 = vrot.lane.b32.xlu0 %v1045, 4
      %v1066 = vpop.permute.xlu0 %1065
      %1067 = vrot.lane.b32.xlu0 %v1048, 4
      %v1068 = vpop.permute.xlu0 %1067
      %v1069 = vunpack.c.l.b16 %v699
      %v1070 = vunpack.c.l.b16 %v709
      %v1071 = vpack.c.b16 %v1070, %v1069
      %1072 = vrot.lane.b32.xlu0 %v1038, 8
      %v1073 = vpop.permute.xlu0 %1072
      %1074 = vrot.lane.b32.xlu0 %v1039, 8
      %v1075 = vpop.permute.xlu0 %1074
      %1076 = vrot.lane.b32.xlu0 %v1040, 8
      %v1077 = vpop.permute.xlu0 %1076
      %1078 = vrot.lane.b32.xlu0 %v1041, 8
      %v1079 = vpop.permute.xlu0 %1078
      %1080 = vrot.lane.b32.xlu0 %v1042, 8
      %v1081 = vpop.permute.xlu0 %1080
      %1082 = vrot.lane.b32.xlu0 %v1043, 8
      %v1083 = vpop.permute.xlu0 %1082
      %1084 = vrot.lane.b32.xlu0 %v1044, 8
      %v1085 = vpop.permute.xlu0 %1084
      %1086 = vrot.lane.b32.xlu0 %v1045, 8
      %v1087 = vpop.permute.xlu0 %1086
      %1088 = vrot.lane.b32.xlu0 %v1048, 8
      %v1089 = vpop.permute.xlu0 %1088
      %1090 = vrot.lane.b32.xlu0 %v1071, 8
      %v1091 = vpop.permute.xlu0 %1090
      %v1092 = vunpack.c.l.b16 %v746
      %v1093 = vunpack.c.l.b16 %v749
      %v1094 = vunpack.c.l.b16 %v753
      %v1095 = vunpack.c.l.b16 %v756
      %v1096 = vunpack.c.l.b16 %v760
      %v1097 = vunpack.c.l.b16 %v763
      %v1098 = vunpack.c.l.b16 %v767
      %v1099 = vunpack.c.l.b16 %v770
      %v1100 = vunpack.c.l.b16 %v774
      %v1101 = vunpack.c.l.b16 %v777
      %v1102 = vunpack.c.l.b16 %v781
      %v1103 = vunpack.c.l.b16 %v784
      %v1104 = vunpack.c.l.b16 %v788
      %v1105 = vunpack.c.l.b16 %v791
      %v1106 = vunpack.c.l.b16 %v795
      %v1107 = vunpack.c.l.b16 %v798
      %v1108 = vunpack.c.l.b16 %v802
      %v1109 = vunpack.c.l.b16 %v805
      %v1110 = vunpack.c.l.b16 %v809
      %v1111 = vunpack.c.l.b16 %v812
      %v1112 = vpack.c.b16 %v1093, %v1092
      %v1113 = vpack.c.b16 %v1095, %v1094
      %v1114 = vpack.c.b16 %v1097, %v1096
      %v1115 = vpack.c.b16 %v1099, %v1098
      %v1116 = vpack.c.b16 %v1101, %v1100
      %v1117 = vpack.c.b16 %v1103, %v1102
      %v1118 = vpack.c.b16 %v1105, %v1104
      %v1119 = vpack.c.b16 %v1107, %v1106
      %v1120 = vpack.c.b16 %v1109, %v1108
      %v1121 = vpack.c.b16 %v1111, %v1110
      %1122 = vrot.lane.b32.xlu0 %v1112, 12
      %v1123 = vpop.permute.xlu0 %1122
      %1124 = vrot.lane.b32.xlu0 %v1113, 12
      %v1125 = vpop.permute.xlu0 %1124
      %1126 = vrot.lane.b32.xlu0 %v1114, 12
      %v1127 = vpop.permute.xlu0 %1126
      %1128 = vrot.lane.b32.xlu0 %v1115, 12
      %v1129 = vpop.permute.xlu0 %1128
      %1130 = vrot.lane.b32.xlu0 %v1116, 12
      %v1131 = vpop.permute.xlu0 %1130
      %1132 = vrot.lane.b32.xlu0 %v1117, 12
      %v1133 = vpop.permute.xlu0 %1132
      %1134 = vrot.lane.b32.xlu0 %v1118, 12
      %v1135 = vpop.permute.xlu0 %1134
      %1136 = vrot.lane.b32.xlu0 %v1119, 12
      %v1137 = vpop.permute.xlu0 %1136
      %1138 = vrot.lane.b32.xlu0 %v1120, 12
      %v1139 = vpop.permute.xlu0 %1138
      %1140 = vrot.lane.b32.xlu0 %v1121, 12
      %v1141 = vpop.permute.xlu0 %1140
      %v1142 = vunpack.c.l.b16 %v819
      %v1143 = vunpack.c.l.b16 %v822
      %v1144 = vpack.c.b16 %v1143, %v1142
      %1145 = vrot.lane.b32.xlu0 %v1113, 16
      %v1146 = vpop.permute.xlu0 %1145
      %1147 = vrot.lane.b32.xlu0 %v1114, 16
      %v1148 = vpop.permute.xlu0 %1147
      %1149 = vrot.lane.b32.xlu0 %v1115, 16
      %v1150 = vpop.permute.xlu0 %1149
      %1151 = vrot.lane.b32.xlu0 %v1116, 16
      %v1152 = vpop.permute.xlu0 %1151
      %1153 = vrot.lane.b32.xlu0 %v1117, 16
      %v1154 = vpop.permute.xlu0 %1153
      %1155 = vrot.lane.b32.xlu0 %v1118, 16
      %v1156 = vpop.permute.xlu0 %1155
      %1157 = vrot.lane.b32.xlu0 %v1119, 16
      %v1158 = vpop.permute.xlu0 %1157
      %1159 = vrot.lane.b32.xlu0 %v1120, 16
      %v1160 = vpop.permute.xlu0 %1159
      %1161 = vrot.lane.b32.xlu0 %v1121, 16
      %v1162 = vpop.permute.xlu0 %1161
      %1163 = vrot.lane.b32.xlu0 %v1144, 16
      %v1164 = vpop.permute.xlu0 %1163
      %v1165 = vunpack.c.l.b16 %v829
      %v1166 = vunpack.c.l.b16 %v832
      %v1167 = vpack.c.b16 %v1166, %v1165
      %1168 = vrot.lane.b32.xlu0 %v1114, 20
      %v1169 = vpop.permute.xlu0 %1168
      %1170 = vrot.lane.b32.xlu0 %v1115, 20
      %v1171 = vpop.permute.xlu0 %1170
      %1172 = vrot.lane.b32.xlu0 %v1116, 20
      %v1173 = vpop.permute.xlu0 %1172
      %1174 = vrot.lane.b32.xlu0 %v1117, 20
      %v1175 = vpop.permute.xlu0 %1174
      %1176 = vrot.lane.b32.xlu0 %v1118, 20
      %v1177 = vpop.permute.xlu0 %1176
      %1178 = vrot.lane.b32.xlu0 %v1119, 20
      %v1179 = vpop.permute.xlu0 %1178
      %1180 = vrot.lane.b32.xlu0 %v1120, 20
      %v1181 = vpop.permute.xlu0 %1180
      %1182 = vrot.lane.b32.xlu0 %v1121, 20
      %v1183 = vpop.permute.xlu0 %1182
      %1184 = vrot.lane.b32.xlu0 %v1144, 20
      %v1185 = vpop.permute.xlu0 %1184
      %1186 = vrot.lane.b32.xlu0 %v1167, 20
      %v1187 = vpop.permute.xlu0 %1186
      %v1188 = vunpack.c.l.b16 %v843
      %v1189 = vunpack.c.l.b16 %v850
      %v1190 = vunpack.c.l.b16 %v858
      %v1191 = vunpack.c.l.b16 %v865
      %v1192 = vunpack.c.l.b16 %v873
      %v1193 = vunpack.c.l.b16 %v880
      %v1194 = vunpack.c.l.b16 %v888
      %v1195 = vunpack.c.l.b16 %v895
      %v1196 = vunpack.c.l.b16 %v903
      %v1197 = vunpack.c.l.b16 %v910
      %v1198 = vunpack.c.l.b16 %v918
      %v1199 = vunpack.c.l.b16 %v925
      %v1200 = vunpack.c.l.b16 %v933
      %v1201 = vunpack.c.l.b16 %v940
      %v1202 = vunpack.c.l.b16 %v948
      %v1203 = vunpack.c.l.b16 %v955
      %v1204 = vunpack.c.l.b16 %v963
      %v1205 = vunpack.c.l.b16 %v970
      %v1206 = vunpack.c.l.b16 %v978
      %v1207 = vunpack.c.l.b16 %v985
      %v1208 = vpack.c.b16 %v1189, %v1188
      %v1209 = vpack.c.b16 %v1191, %v1190
      %v1210 = vpack.c.b16 %v1193, %v1192
      %v1211 = vpack.c.b16 %v1195, %v1194
      %v1212 = vpack.c.b16 %v1197, %v1196
      %v1213 = vpack.c.b16 %v1199, %v1198
      %v1214 = vpack.c.b16 %v1201, %v1200
      %v1215 = vpack.c.b16 %v1203, %v1202
      %v1216 = vpack.c.b16 %v1205, %v1204
      %v1217 = vpack.c.b16 %v1207, %v1206
      %1218 = vrot.lane.b32.xlu0 %v1208, 24
      %v1219 = vpop.permute.xlu0 %1218
      %1220 = vrot.lane.b32.xlu0 %v1209, 24
      %v1221 = vpop.permute.xlu0 %1220
      %1222 = vrot.lane.b32.xlu0 %v1210, 24
      %v1223 = vpop.permute.xlu0 %1222
      %1224 = vrot.lane.b32.xlu0 %v1211, 24
      %v1225 = vpop.permute.xlu0 %1224
      %1226 = vrot.lane.b32.xlu0 %v1212, 24
      %v1227 = vpop.permute.xlu0 %1226
      %1228 = vrot.lane.b32.xlu0 %v1213, 24
      %v1229 = vpop.permute.xlu0 %1228
      %1230 = vrot.lane.b32.xlu0 %v1214, 24
      %v1231 = vpop.permute.xlu0 %1230
      %1232 = vrot.lane.b32.xlu0 %v1215, 24
      %v1233 = vpop.permute.xlu0 %1232
      %1234 = vrot.lane.b32.xlu0 %v1216, 24
      %v1235 = vpop.permute.xlu0 %1234
      %1236 = vrot.lane.b32.xlu0 %v1217, 24
      %v1237 = vpop.permute.xlu0 %1236
      %v1238 = vunpack.c.l.b16 %v993
      %v1239 = vunpack.c.l.b16 %v1000
      %v1240 = vpack.c.b16 %v1239, %v1238
      %1241 = vrot.lane.b32.xlu0 %v1209, 28
      %v1242 = vpop.permute.xlu0 %1241
      %1243 = vrot.lane.b32.xlu0 %v1210, 28
      %v1244 = vpop.permute.xlu0 %1243
      %1245 = vrot.lane.b32.xlu0 %v1211, 28
      %v1246 = vpop.permute.xlu0 %1245
      %1247 = vrot.lane.b32.xlu0 %v1212, 28
      %v1248 = vpop.permute.xlu0 %1247
      %1249 = vrot.lane.b32.xlu0 %v1213, 28
      %v1250 = vpop.permute.xlu0 %1249
      %1251 = vrot.lane.b32.xlu0 %v1214, 28
      %v1252 = vpop.permute.xlu0 %1251
      %1253 = vrot.lane.b32.xlu0 %v1215, 28
      %v1254 = vpop.permute.xlu0 %1253
      %1255 = vrot.lane.b32.xlu0 %v1216, 28
      %v1256 = vpop.permute.xlu0 %1255
      %1257 = vrot.lane.b32.xlu0 %v1217, 28
      %v1258 = vpop.permute.xlu0 %1257
      %1259 = vrot.lane.b32.xlu0 %v1240, 28
      %v1260 = vpop.permute.xlu0 %1259
      %v1261 = vunpack.c.l.b16 %v1008
      %v1262 = vunpack.c.l.b16 %v1015
      %v1263 = vpack.c.b16 %v1262, %v1261
      %1264 = vrot.lane.b32.xlu0 %v1210, 32
      %v1265 = vpop.permute.xlu0 %1264
      %1266 = vrot.lane.b32.xlu0 %v1211, 32
      %v1267 = vpop.permute.xlu0 %1266
      %1268 = vrot.lane.b32.xlu0 %v1212, 32
      %v1269 = vpop.permute.xlu0 %1268
      %1270 = vrot.lane.b32.xlu0 %v1213, 32
      %v1271 = vpop.permute.xlu0 %1270
      %1272 = vrot.lane.b32.xlu0 %v1214, 32
      %v1273 = vpop.permute.xlu0 %1272
      %1274 = vrot.lane.b32.xlu0 %v1215, 32
      %v1275 = vpop.permute.xlu0 %1274
      %1276 = vrot.lane.b32.xlu0 %v1216, 32
      %v1277 = vpop.permute.xlu0 %1276
      %1278 = vrot.lane.b32.xlu0 %v1217, 32
      %v1279 = vpop.permute.xlu0 %1278
      %1280 = vrot.lane.b32.xlu0 %v1240, 32
      %v1281 = vpop.permute.xlu0 %1280
      %1282 = vrot.lane.b32.xlu0 %v1263, 32
      %v1283 = vpop.permute.xlu0 %1282
      %vm1284 = vcmask 31744
      %v1287 = vsel %vm1284, %v1036, %v1050
      %v1290 = vsel %vm1284, %v1037, %v1052
      %v1293 = vsel %vm1284, %v1038, %v1054
      %v1296 = vsel %vm1284, %v1039, %v1056
      %v1299 = vsel %vm1284, %v1040, %v1058
      %v1302 = vsel %vm1284, %v1041, %v1060
      %v1305 = vsel %vm1284, %v1042, %v1062
      %v1308 = vsel %vm1284, %v1043, %v1064
      %v1311 = vsel %vm1284, %v1044, %v1066
      %v1314 = vsel %vm1284, %v1045, %v1068
      %vm1315 = vcmask 64512
      %v1317 = vsel %vm1315, %v1287, %v1073
      %v1319 = vsel %vm1315, %v1290, %v1075
      %v1321 = vsel %vm1315, %v1293, %v1077
      %v1323 = vsel %vm1315, %v1296, %v1079
      %v1325 = vsel %vm1315, %v1299, %v1081
      %v1327 = vsel %vm1315, %v1302, %v1083
      %v1329 = vsel %vm1315, %v1305, %v1085
      %v1331 = vsel %vm1315, %v1308, %v1087
      %v1333 = vsel %vm1315, %v1311, %v1089
      %v1335 = vsel %vm1315, %v1314, %v1091
      %vm1336 = vcmask 97280
      %v1338 = vsel %vm1336, %v1317, %v1123
      %v1340 = vsel %vm1336, %v1319, %v1125
      %v1342 = vsel %vm1336, %v1321, %v1127
      %v1344 = vsel %vm1336, %v1323, %v1129
      %v1346 = vsel %vm1336, %v1325, %v1131
      %v1348 = vsel %vm1336, %v1327, %v1133
      %v1350 = vsel %vm1336, %v1329, %v1135
      %v1352 = vsel %vm1336, %v1331, %v1137
      %v1354 = vsel %vm1336, %v1333, %v1139
      %v1356 = vsel %vm1336, %v1335, %v1141
      %vm1357 = vcmask 130048
      %v1359 = vsel %vm1357, %v1338, %v1146
      %v1361 = vsel %vm1357, %v1340, %v1148
      %v1363 = vsel %vm1357, %v1342, %v1150
      %v1365 = vsel %vm1357, %v1344, %v1152
      %v1367 = vsel %vm1357, %v1346, %v1154
      %v1369 = vsel %vm1357, %v1348, %v1156
      %v1371 = vsel %vm1357, %v1350, %v1158
      %v1373 = vsel %vm1357, %v1352, %v1160
      %v1375 = vsel %vm1357, %v1354, %v1162
      %v1377 = vsel %vm1357, %v1356, %v1164
      %vm1378 = vcmask 162816
      %v1380 = vsel %vm1378, %v1359, %v1169
      %v1382 = vsel %vm1378, %v1361, %v1171
      %v1384 = vsel %vm1378, %v1363, %v1173
      %v1386 = vsel %vm1378, %v1365, %v1175
      %v1388 = vsel %vm1378, %v1367, %v1177
      %v1390 = vsel %vm1378, %v1369, %v1179
      %v1392 = vsel %vm1378, %v1371, %v1181
      %v1394 = vsel %vm1378, %v1373, %v1183
      %v1396 = vsel %vm1378, %v1375, %v1185
      %v1398 = vsel %vm1378, %v1377, %v1187
      %vm1399 = vcmask 195584
      %v1401 = vsel %vm1399, %v1380, %v1219
      %v1403 = vsel %vm1399, %v1382, %v1221
      %v1405 = vsel %vm1399, %v1384, %v1223
      %v1407 = vsel %vm1399, %v1386, %v1225
      %v1409 = vsel %vm1399, %v1388, %v1227
      %v1411 = vsel %vm1399, %v1390, %v1229
      %v1413 = vsel %vm1399, %v1392, %v1231
      %v1415 = vsel %vm1399, %v1394, %v1233
      %v1417 = vsel %vm1399, %v1396, %v1235
      %v1419 = vsel %vm1399, %v1398, %v1237
      %vm1420 = vcmask 228352
      %v1422 = vsel %vm1420, %v1401, %v1242
      %v1424 = vsel %vm1420, %v1403, %v1244
      %v1426 = vsel %vm1420, %v1405, %v1246
      %v1428 = vsel %vm1420, %v1407, %v1248
      %v1430 = vsel %vm1420, %v1409, %v1250
      %v1432 = vsel %vm1420, %v1411, %v1252
      %v1434 = vsel %vm1420, %v1413, %v1254
      %v1436 = vsel %vm1420, %v1415, %v1256
      %v1438 = vsel %vm1420, %v1417, %v1258
      %v1440 = vsel %vm1420, %v1419, %v1260
      %vm1441 = vcmask 261120
      %v1443 = vsel %vm1441, %v1422, %v1265
      %v1445 = vsel %vm1441, %v1424, %v1267
      %v1447 = vsel %vm1441, %v1426, %v1269
      %v1449 = vsel %vm1441, %v1428, %v1271
      %v1451 = vsel %vm1441, %v1430, %v1273
      %v1453 = vsel %vm1441, %v1432, %v1275
      %v1455 = vsel %vm1441, %v1434, %v1277
      %v1457 = vsel %vm1441, %v1436, %v1279
      %v1459 = vsel %vm1441, %v1438, %v1281
      %v1461 = vsel %vm1441, %v1440, %v1283
      %v1462 = vld [vmem:[%s2] sm:$0xf]
      %v1463 = vld [vmem:[%s2 + $0x4] sm:$0xf]
      %v1464 = vld [vmem:[%s2 + $0x8] sm:$0xf]
      %v1465 = vld [vmem:[%s2 + $0xc] sm:$0xf]
      %v1466 = vld [vmem:[%s2 + $0x10] sm:$0x3]
      %v1467 = vld [vmem:[%s5] sm:$0x1]
      %v1469 = vperm.slane %v1467, 0
      %v1476 = vunpack.c.l.b16 %v1462
      %v1477 = vunpack.c.l.b16 %v1463
      %v1478 = vunpack.c.l.b16 %v1464
      %v1479 = vunpack.c.l.b16 %v1465
      %v1480 = vunpack.c.l.b16 %v1466
      %v1481 = vpack.c.b16 %v1477, %v1476
      %v1482 = vpack.c.b16 %v1479, %v1478
      %v1483 = vpack.c.b16 %v1480, %v1480
      %vm1486 = vcmask 293888
      %v1487 = vsel %vm1486, %v1443, 0
      %v1489 = vsel %vm1486, %v1445, 0
      %v1491 = vsel %vm1486, %v1447, 0
      %v1493 = vsel %vm1486, %v1449, 0
      %v1495 = vsel %vm1486, %v1451, 0
      %v1497 = vsel %vm1486, %v1453, 0
      %v1499 = vsel %vm1486, %v1455, 0
      %v1501 = vsel %vm1486, %v1457, 0
      %v1503 = vsel %vm1486, %v1459, 0
      %v1505 = vsel %vm1486, %v1461, 0
      %vm1507 = vcmask 1041408
      %v1509 = vsel %vm1507, %v1483, 0
      %1511 = vmatpush.bf16.msra.mxu0 0
      %1512 = vmatpush.bf16.msra.mxu0 0
      %1513 = vmatpush.bf16.msra.mxu0 0
      %1514 = vmatpush.bf16.msra.mxu0 0
      %1515 = vmatpush.bf16.msra.mxu0 0
      %1516 = vmatpush.bf16.msra.mxu0 %v1509
      %1517 = vmatpush.bf16.msra.mxu0 %v1482
      %1518 = vmatpush.bf16.msra.mxu0 %v1481
      %1519 = vmatmul.bf16.gmra.mxu0 %v1487
      %v1520 = vpop.f32.mrf.mxu0
      %v1521 = vadd.f32 %v1469, %v1520
      %v1522 = vpop.f32.mrf.mxu0
      %v1523 = vadd.f32 %v1469, %v1522
      %1524 = vmatmul.bf16.gmra.mxu0 %v1489
      %v1525 = vpop.f32.mrf.mxu0
      %v1526 = vadd.f32 %v1469, %v1525
      %v1527 = vpop.f32.mrf.mxu0
      %v1528 = vadd.f32 %v1469, %v1527
      %1529 = vmatmul.bf16.gmra.mxu0 %v1491
      %v1530 = vpop.f32.mrf.mxu0
      %v1531 = vadd.f32 %v1469, %v1530
      %v1532 = vpop.f32.mrf.mxu0
      %v1533 = vadd.f32 %v1469, %v1532
      %1534 = vmatmul.bf16.gmra.mxu0 %v1493
      %v1535 = vpop.f32.mrf.mxu0
      %v1536 = vadd.f32 %v1469, %v1535
      %v1537 = vpop.f32.mrf.mxu0
      %v1538 = vadd.f32 %v1469, %v1537
      %1539 = vmatmul.bf16.gmra.mxu0 %v1495
      %v1540 = vpop.f32.mrf.mxu0
      %v1541 = vadd.f32 %v1469, %v1540
      %v1542 = vpop.f32.mrf.mxu0
      %v1543 = vadd.f32 %v1469, %v1542
      %1544 = vmatmul.bf16.gmra.mxu0 %v1497
      %v1545 = vpop.f32.mrf.mxu0
      %v1546 = vadd.f32 %v1469, %v1545
      %v1547 = vpop.f32.mrf.mxu0
      %v1548 = vadd.f32 %v1469, %v1547
      %1549 = vmatmul.bf16.gmra.mxu0 %v1499
      %v1550 = vpop.f32.mrf.mxu0
      %v1551 = vadd.f32 %v1469, %v1550
      %v1552 = vpop.f32.mrf.mxu0
      %v1553 = vadd.f32 %v1469, %v1552
      %1554 = vmatmul.bf16.gmra.mxu0 %v1501
      %v1555 = vpop.f32.mrf.mxu0
      %v1556 = vadd.f32 %v1469, %v1555
      %v1557 = vpop.f32.mrf.mxu0
      %v1558 = vadd.f32 %v1469, %v1557
      %1559 = vmatmul.bf16.gmra.mxu0 %v1503
      %v1560 = vpop.f32.mrf.mxu0
      %v1561 = vadd.f32 %v1469, %v1560
      %v1562 = vpop.f32.mrf.mxu0
      %v1563 = vadd.f32 %v1469, %v1562
      %1564 = vmatmul.bf16.gmra.mxu0 %v1505
      %v1565 = vpop.f32.mrf.mxu0
      %v1566 = vadd.f32 %v1469, %v1565
      %v1567 = vpop.f32.mrf.mxu0
      %v1568 = vadd.f32 %v1469, %v1567
      %1569 = vdwg.mxu0
      %v1573 = vrot.slane %v377, 5
      %v1574 = vrot.slane %v1573, 4
      %v1575 = vrot.slane %v378, 5
      %v1576 = vsel %vm742, %v1574, %v1575
      %v1577 = vrot.slane %v1575, 4
      %v1578 = vrot.slane %v379, 5
      %v1579 = vsel %vm742, %v1577, %v1578
      %v1583 = vrot.slane %v416, 5
      %v1584 = vrot.slane %v1583, 4
      %v1585 = vrot.slane %v417, 5
      %v1586 = vsel %vm742, %v1584, %v1585
      %v1587 = vrot.slane %v1585, 4
      %v1588 = vrot.slane %v418, 5
      %v1589 = vsel %vm742, %v1587, %v1588
      %vm1590 = vcmask 1041408
      %vm1591 = vcmask 1045508
      %vm1592 = vmor %vm1590, %vm1591
      %v1593 = vrot.slane %v377, 6
      %v1594 = vrot.slane %v1593, 4
      %v1595 = vrot.slane %v378, 6
      %v1596 = vsel %vm1592, %v1594, %v1595
      %v1597 = vrot.slane %v1595, 4
      %v1598 = vrot.slane %v379, 6
      %v1599 = vsel %vm1592, %v1597, %v1598
      %v1600 = vrot.slane %v380, 6
      %v1601 = vrot.slane %v1600, 4
      %v1602 = vrot.slane %v381, 6
      %v1603 = vsel %vm1592, %v1601, %v1602
      %v1604 = vrot.slane %v1602, 4
      %v1605 = vrot.slane %v382, 6
      %v1606 = vsel %vm1592, %v1604, %v1605
      %v1607 = vrot.slane %v383, 6
      %v1608 = vrot.slane %v1607, 4
      %v1609 = vrot.slane %v384, 6
      %v1610 = vsel %vm1592, %v1608, %v1609
      %v1611 = vrot.slane %v1609, 4
      %v1612 = vrot.slane %v385, 6
      %v1613 = vsel %vm1592, %v1611, %v1612
      %v1614 = vrot.slane %v386, 6
      %v1615 = vrot.slane %v1614, 4
      %v1616 = vrot.slane %v387, 6
      %v1617 = vsel %vm1592, %v1615, %v1616
      %v1618 = vrot.slane %v1616, 4
      %v1619 = vrot.slane %v388, 6
      %v1620 = vsel %vm1592, %v1618, %v1619
      %v1621 = vrot.slane %v389, 6
      %v1622 = vrot.slane %v1621, 4
      %v1623 = vrot.slane %v390, 6
      %v1624 = vsel %vm1592, %v1622, %v1623
      %v1625 = vrot.slane %v1623, 4
      %v1626 = vrot.slane %v391, 6
      %v1627 = vsel %vm1592, %v1625, %v1626
      %v1628 = vrot.slane %v392, 6
      %v1629 = vrot.slane %v1628, 4
      %v1630 = vrot.slane %v393, 6
      %v1631 = vsel %vm1592, %v1629, %v1630
      %v1632 = vrot.slane %v1630, 4
      %v1633 = vrot.slane %v394, 6
      %v1634 = vsel %vm1592, %v1632, %v1633
      %v1635 = vrot.slane %v395, 6
      %v1636 = vrot.slane %v1635, 4
      %v1637 = vrot.slane %v396, 6
      %v1638 = vsel %vm1592, %v1636, %v1637
      %v1639 = vrot.slane %v1637, 4
      %v1640 = vrot.slane %v397, 6
      %v1641 = vsel %vm1592, %v1639, %v1640
      %v1642 = vrot.slane %v398, 6
      %v1643 = vrot.slane %v1642, 4
      %v1644 = vrot.slane %v399, 6
      %v1645 = vsel %vm1592, %v1643, %v1644
      %v1646 = vrot.slane %v1644, 4
      %v1647 = vrot.slane %v400, 6
      %v1648 = vsel %vm1592, %v1646, %v1647
      %v1649 = vrot.slane %v401, 6
      %v1650 = vrot.slane %v1649, 4
      %v1651 = vrot.slane %v402, 6
      %v1652 = vsel %vm1592, %v1650, %v1651
      %v1653 = vrot.slane %v1651, 4
      %v1654 = vrot.slane %v403, 6
      %v1655 = vsel %vm1592, %v1653, %v1654
      %v1656 = vrot.slane %v404, 6
      %v1657 = vrot.slane %v1656, 4
      %v1658 = vrot.slane %v405, 6
      %v1659 = vsel %vm1592, %v1657, %v1658
      %v1660 = vrot.slane %v1658, 4
      %v1661 = vrot.slane %v406, 6
      %v1662 = vsel %vm1592, %v1660, %v1661
      %v1663 = vrot.slane %v407, 6
      %v1664 = vrot.slane %v1663, 4
      %v1665 = vrot.slane %v408, 6
      %v1666 = vsel %vm1592, %v1664, %v1665
      %v1667 = vrot.slane %v1665, 4
      %v1668 = vrot.slane %v409, 6
      %v1669 = vsel %vm1592, %v1667, %v1668
      %v1670 = vrot.slane %v410, 6
      %v1671 = vrot.slane %v1670, 4
      %v1672 = vrot.slane %v411, 6
      %v1673 = vsel %vm1592, %v1671, %v1672
      %v1674 = vrot.slane %v1672, 4
      %v1675 = vrot.slane %v412, 6
      %v1676 = vsel %vm1592, %v1674, %v1675
      %v1677 = vrot.slane %v413, 6
      %v1678 = vrot.slane %v1677, 4
      %v1679 = vrot.slane %v414, 6
      %v1680 = vsel %vm1592, %v1678, %v1679
      %v1681 = vrot.slane %v1679, 4
      %v1682 = vrot.slane %v415, 6
      %v1683 = vsel %vm1592, %v1681, %v1682
      %v1684 = vrot.slane %v416, 6
      %v1685 = vrot.slane %v1684, 4
      %v1686 = vrot.slane %v417, 6
      %v1687 = vsel %vm1592, %v1685, %v1686
      %v1688 = vrot.slane %v1686, 4
      %v1689 = vrot.slane %v418, 6
      %v1690 = vsel %vm1592, %v1688, %v1689
      %v1691 = vunpack.c.l.b16 %v377
      %v1692 = vunpack.c.l.b16 %v378
      %v1693 = vunpack.c.l.b16 %v380
      %v1694 = vunpack.c.l.b16 %v381
      %v1695 = vunpack.c.l.b16 %v383
      %v1696 = vunpack.c.l.b16 %v384
      %v1697 = vunpack.c.l.b16 %v386
      %v1698 = vunpack.c.l.b16 %v387
      %v1699 = vunpack.c.l.b16 %v389
      %v1700 = vunpack.c.l.b16 %v390
      %v1701 = vunpack.c.l.b16 %v392
      %v1702 = vunpack.c.l.b16 %v393
      %v1703 = vunpack.c.l.b16 %v395
      %v1704 = vunpack.c.l.b16 %v396
      %v1705 = vunpack.c.l.b16 %v398
      %v1706 = vunpack.c.l.b16 %v399
      %v1707 = vunpack.c.l.b16 %v401
      %v1708 = vunpack.c.l.b16 %v402
      %v1709 = vunpack.c.l.b16 %v404
      %v1710 = vunpack.c.l.b16 %v405
      %v1711 = vpack.c.b16 %v1692, %v1691
      %v1712 = vpack.c.b16 %v1694, %v1693
      %v1713 = vpack.c.b16 %v1696, %v1695
      %v1714 = vpack.c.b16 %v1698, %v1697
      %v1715 = vpack.c.b16 %v1700, %v1699
      %v1716 = vpack.c.b16 %v1702, %v1701
      %v1717 = vpack.c.b16 %v1704, %v1703
      %v1718 = vpack.c.b16 %v1706, %v1705
      %v1719 = vpack.c.b16 %v1708, %v1707
      %v1720 = vpack.c.b16 %v1710, %v1709
      %v1721 = vunpack.c.l.b16 %v407
      %v1722 = vunpack.c.l.b16 %v408
      %v1723 = vunpack.c.l.b16 %v410
      %v1724 = vunpack.c.l.b16 %v411
      %v1725 = vpack.c.b16 %v1722, %v1721
      %v1726 = vpack.c.b16 %v1724, %v1723
      %1727 = vrot.lane.b32.xlu0 %v1713, 4
      %v1728 = vpop.permute.xlu0 %1727
      %1729 = vrot.lane.b32.xlu0 %v1714, 4
      %v1730 = vpop.permute.xlu0 %1729
      %1731 = vrot.lane.b32.xlu0 %v1715, 4
      %v1732 = vpop.permute.xlu0 %1731
      %1733 = vrot.lane.b32.xlu0 %v1716, 4
      %v1734 = vpop.permute.xlu0 %1733
      %1735 = vrot.lane.b32.xlu0 %v1717, 4
      %v1736 = vpop.permute.xlu0 %1735
      %1737 = vrot.lane.b32.xlu0 %v1718, 4
      %v1738 = vpop.permute.xlu0 %1737
      %1739 = vrot.lane.b32.xlu0 %v1719, 4
      %v1740 = vpop.permute.xlu0 %1739
      %1741 = vrot.lane.b32.xlu0 %v1720, 4
      %v1742 = vpop.permute.xlu0 %1741
      %1743 = vrot.lane.b32.xlu0 %v1725, 4
      %v1744 = vpop.permute.xlu0 %1743
      %1745 = vrot.lane.b32.xlu0 %v1726, 4
      %v1746 = vpop.permute.xlu0 %1745
      %v1747 = vunpack.c.l.b16 %v413
      %v1748 = vunpack.c.l.b16 %v414
      %v1749 = vunpack.c.l.b16 %v416
      %v1750 = vunpack.c.l.b16 %v417
      %v1751 = vpack.c.b16 %v1748, %v1747
      %v1752 = vpack.c.b16 %v1750, %v1749
      %1753 = vrot.lane.b32.xlu0 %v1715, 8
      %v1754 = vpop.permute.xlu0 %1753
      %1755 = vrot.lane.b32.xlu0 %v1716, 8
      %v1756 = vpop.permute.xlu0 %1755
      %1757 = vrot.lane.b32.xlu0 %v1717, 8
      %v1758 = vpop.permute.xlu0 %1757
      %1759 = vrot.lane.b32.xlu0 %v1718, 8
      %v1760 = vpop.permute.xlu0 %1759
      %1761 = vrot.lane.b32.xlu0 %v1719, 8
      %v1762 = vpop.permute.xlu0 %1761
      %1763 = vrot.lane.b32.xlu0 %v1720, 8
      %v1764 = vpop.permute.xlu0 %1763
      %1765 = vrot.lane.b32.xlu0 %v1725, 8
      %v1766 = vpop.permute.xlu0 %1765
      %1767 = vrot.lane.b32.xlu0 %v1726, 8
      %v1768 = vpop.permute.xlu0 %1767
      %1769 = vrot.lane.b32.xlu0 %v1751, 8
      %v1770 = vpop.permute.xlu0 %1769
      %1771 = vrot.lane.b32.xlu0 %v1752, 8
      %v1772 = vpop.permute.xlu0 %1771
      %v1773 = vunpack.c.l.b16 %v1576
      %v1774 = vunpack.c.l.b16 %v1579
      %v1775 = vpack.c.b16 %v1774, %v1773
      %1776 = vrot.lane.b32.xlu0 %v1775, 12
      %v1777 = vpop.permute.xlu0 %1776
      %v1778 = vunpack.c.l.b16 %v1586
      %v1779 = vunpack.c.l.b16 %v1589
      %v1780 = vpack.c.b16 %v1779, %v1778
      %1781 = vrot.lane.b32.xlu0 %v1780, 20
      %v1782 = vpop.permute.xlu0 %1781
      %v1783 = vunpack.c.l.b16 %v1596
      %v1784 = vunpack.c.l.b16 %v1599
      %v1785 = vunpack.c.l.b16 %v1603
      %v1786 = vunpack.c.l.b16 %v1606
      %v1787 = vunpack.c.l.b16 %v1610
      %v1788 = vunpack.c.l.b16 %v1613
      %v1789 = vunpack.c.l.b16 %v1617
      %v1790 = vunpack.c.l.b16 %v1620
      %v1791 = vunpack.c.l.b16 %v1624
      %v1792 = vunpack.c.l.b16 %v1627
      %v1793 = vunpack.c.l.b16 %v1631
      %v1794 = vunpack.c.l.b16 %v1634
      %v1795 = vunpack.c.l.b16 %v1638
      %v1796 = vunpack.c.l.b16 %v1641
      %v1797 = vunpack.c.l.b16 %v1645
      %v1798 = vunpack.c.l.b16 %v1648
      %v1799 = vunpack.c.l.b16 %v1652
      %v1800 = vunpack.c.l.b16 %v1655
      %v1801 = vunpack.c.l.b16 %v1659
      %v1802 = vunpack.c.l.b16 %v1662
      %v1803 = vpack.c.b16 %v1784, %v1783
      %v1804 = vpack.c.b16 %v1786, %v1785
      %v1805 = vpack.c.b16 %v1788, %v1787
      %v1806 = vpack.c.b16 %v1790, %v1789
      %v1807 = vpack.c.b16 %v1792, %v1791
      %v1808 = vpack.c.b16 %v1794, %v1793
      %v1809 = vpack.c.b16 %v1796, %v1795
      %v1810 = vpack.c.b16 %v1798, %v1797
      %v1811 = vpack.c.b16 %v1800, %v1799
      %v1812 = vpack.c.b16 %v1802, %v1801
      %1813 = vrot.lane.b32.xlu0 %v1803, 24
      %v1814 = vpop.permute.xlu0 %1813
      %1815 = vrot.lane.b32.xlu0 %v1804, 24
      %v1816 = vpop.permute.xlu0 %1815
      %1817 = vrot.lane.b32.xlu0 %v1805, 24
      %v1818 = vpop.permute.xlu0 %1817
      %1819 = vrot.lane.b32.xlu0 %v1806, 24
      %v1820 = vpop.permute.xlu0 %1819
      %1821 = vrot.lane.b32.xlu0 %v1807, 24
      %v1822 = vpop.permute.xlu0 %1821
      %1823 = vrot.lane.b32.xlu0 %v1808, 24
      %v1824 = vpop.permute.xlu0 %1823
      %1825 = vrot.lane.b32.xlu0 %v1809, 24
      %v1826 = vpop.permute.xlu0 %1825
      %1827 = vrot.lane.b32.xlu0 %v1810, 24
      %v1828 = vpop.permute.xlu0 %1827
      %1829 = vrot.lane.b32.xlu0 %v1811, 24
      %v1830 = vpop.permute.xlu0 %1829
      %1831 = vrot.lane.b32.xlu0 %v1812, 24
      %v1832 = vpop.permute.xlu0 %1831
      %v1833 = vunpack.c.l.b16 %v1666
      %v1834 = vunpack.c.l.b16 %v1669
      %v1835 = vunpack.c.l.b16 %v1673
      %v1836 = vunpack.c.l.b16 %v1676
      %v1837 = vpack.c.b16 %v1834, %v1833
      %v1838 = vpack.c.b16 %v1836, %v1835
      %1839 = vrot.lane.b32.xlu0 %v1805, 28
      %v1840 = vpop.permute.xlu0 %1839
      %1841 = vrot.lane.b32.xlu0 %v1806, 28
      %v1842 = vpop.permute.xlu0 %1841
      %1843 = vrot.lane.b32.xlu0 %v1807, 28
      %v1844 = vpop.permute.xlu0 %1843
      %1845 = vrot.lane.b32.xlu0 %v1808, 28
      %v1846 = vpop.permute.xlu0 %1845
      %1847 = vrot.lane.b32.xlu0 %v1809, 28
      %v1848 = vpop.permute.xlu0 %1847
      %1849 = vrot.lane.b32.xlu0 %v1810, 28
      %v1850 = vpop.permute.xlu0 %1849
      %1851 = vrot.lane.b32.xlu0 %v1811, 28
      %v1852 = vpop.permute.xlu0 %1851
      %1853 = vrot.lane.b32.xlu0 %v1812, 28
      %v1854 = vpop.permute.xlu0 %1853
      %1855 = vrot.lane.b32.xlu0 %v1837, 28
      %v1856 = vpop.permute.xlu0 %1855
      %1857 = vrot.lane.b32.xlu0 %v1838, 28
      %v1858 = vpop.permute.xlu0 %1857
      %v1859 = vunpack.c.l.b16 %v1680
      %v1860 = vunpack.c.l.b16 %v1683
      %v1861 = vunpack.c.l.b16 %v1687
      %v1862 = vunpack.c.l.b16 %v1690
      %v1863 = vpack.c.b16 %v1860, %v1859
      %v1864 = vpack.c.b16 %v1862, %v1861
      %1865 = vrot.lane.b32.xlu0 %v1807, 32
      %v1866 = vpop.permute.xlu0 %1865
      %1867 = vrot.lane.b32.xlu0 %v1808, 32
      %v1868 = vpop.permute.xlu0 %1867
      %1869 = vrot.lane.b32.xlu0 %v1809, 32
      %v1870 = vpop.permute.xlu0 %1869
      %1871 = vrot.lane.b32.xlu0 %v1810, 32
      %v1872 = vpop.permute.xlu0 %1871
      %1873 = vrot.lane.b32.xlu0 %v1811, 32
      %v1874 = vpop.permute.xlu0 %1873
      %1875 = vrot.lane.b32.xlu0 %v1812, 32
      %v1876 = vpop.permute.xlu0 %1875
      %1877 = vrot.lane.b32.xlu0 %v1837, 32
      %v1878 = vpop.permute.xlu0 %1877
      %1879 = vrot.lane.b32.xlu0 %v1838, 32
      %v1880 = vpop.permute.xlu0 %1879
      %1881 = vrot.lane.b32.xlu0 %v1863, 32
      %v1882 = vpop.permute.xlu0 %1881
      %1883 = vrot.lane.b32.xlu0 %v1864, 32
      %v1884 = vpop.permute.xlu0 %1883
      %v1887 = vsel %vm1284, %v1711, %v1728
      %v1890 = vsel %vm1284, %v1712, %v1730
      %v1893 = vsel %vm1284, %v1713, %v1732
      %v1896 = vsel %vm1284, %v1714, %v1734
      %v1899 = vsel %vm1284, %v1715, %v1736
      %v1902 = vsel %vm1284, %v1716, %v1738
      %v1905 = vsel %vm1284, %v1717, %v1740
      %v1908 = vsel %vm1284, %v1718, %v1742
      %v1911 = vsel %vm1284, %v1719, %v1744
      %v1914 = vsel %vm1284, %v1720, %v1746
      %v1916 = vsel %vm1315, %v1887, %v1754
      %v1918 = vsel %vm1315, %v1890, %v1756
      %v1920 = vsel %vm1315, %v1893, %v1758
      %v1922 = vsel %vm1315, %v1896, %v1760
      %v1924 = vsel %vm1315, %v1899, %v1762
      %v1926 = vsel %vm1315, %v1902, %v1764
      %v1928 = vsel %vm1315, %v1905, %v1766
      %v1930 = vsel %vm1315, %v1908, %v1768
      %v1932 = vsel %vm1315, %v1911, %v1770
      %v1934 = vsel %vm1315, %v1914, %v1772
      %v1936 = vsel %vm1336, %v1916, %v1777
      %v1937 = vsel %vm1336, %v1918, %v1123
      %v1938 = vsel %vm1336, %v1920, %v1125
      %v1939 = vsel %vm1336, %v1922, %v1127
      %v1940 = vsel %vm1336, %v1924, %v1129
      %v1941 = vsel %vm1336, %v1926, %v1131
      %v1942 = vsel %vm1336, %v1928, %v1133
      %v1943 = vsel %vm1336, %v1930, %v1135
      %v1944 = vsel %vm1336, %v1932, %v1137
      %v1945 = vsel %vm1336, %v1934, %v1139
      %v1946 = vsel %vm1357, %v1936, %v1146
      %v1947 = vsel %vm1357, %v1937, %v1148
      %v1948 = vsel %vm1357, %v1938, %v1150
      %v1949 = vsel %vm1357, %v1939, %v1152
      %v1950 = vsel %vm1357, %v1940, %v1154
      %v1951 = vsel %vm1357, %v1941, %v1156
      %v1952 = vsel %vm1357, %v1942, %v1158
      %v1953 = vsel %vm1357, %v1943, %v1160
      %v1954 = vsel %vm1357, %v1944, %v1162
      %v1955 = vsel %vm1357, %v1945, %v1164
      %v1956 = vsel %vm1378, %v1946, %v1171
      %v1957 = vsel %vm1378, %v1947, %v1173
      %v1958 = vsel %vm1378, %v1948, %v1175
      %v1959 = vsel %vm1378, %v1949, %v1177
      %v1960 = vsel %vm1378, %v1950, %v1179
      %v1961 = vsel %vm1378, %v1951, %v1181
      %v1962 = vsel %vm1378, %v1952, %v1183
      %v1963 = vsel %vm1378, %v1953, %v1185
      %v1964 = vsel %vm1378, %v1954, %v1187
      %v1966 = vsel %vm1378, %v1955, %v1782
      %v1968 = vsel %vm1399, %v1956, %v1814
      %v1970 = vsel %vm1399, %v1957, %v1816
      %v1972 = vsel %vm1399, %v1958, %v1818
      %v1974 = vsel %vm1399, %v1959, %v1820
      %v1976 = vsel %vm1399, %v1960, %v1822
      %v1978 = vsel %vm1399, %v1961, %v1824
      %v1980 = vsel %vm1399, %v1962, %v1826
      %v1982 = vsel %vm1399, %v1963, %v1828
      %v1984 = vsel %vm1399, %v1964, %v1830
      %v1986 = vsel %vm1399, %v1966, %v1832
      %v1988 = vsel %vm1420, %v1968, %v1840
      %v1990 = vsel %vm1420, %v1970, %v1842
      %v1992 = vsel %vm1420, %v1972, %v1844
      %v1994 = vsel %vm1420, %v1974, %v1846
      %v1996 = vsel %vm1420, %v1976, %v1848
      %v1998 = vsel %vm1420, %v1978, %v1850
      %v2000 = vsel %vm1420, %v1980, %v1852
      %v2002 = vsel %vm1420, %v1982, %v1854
      %v2004 = vsel %vm1420, %v1984, %v1856
      %v2006 = vsel %vm1420, %v1986, %v1858
      %v2008 = vsel %vm1441, %v1988, %v1866
      %v2010 = vsel %vm1441, %v1990, %v1868
      %v2012 = vsel %vm1441, %v1992, %v1870
      %v2014 = vsel %vm1441, %v1994, %v1872
      %v2016 = vsel %vm1441, %v1996, %v1874
      %v2018 = vsel %vm1441, %v1998, %v1876
      %v2020 = vsel %vm1441, %v2000, %v1878
      %v2022 = vsel %vm1441, %v2002, %v1880
      %v2024 = vsel %vm1441, %v2004, %v1882
      %v2026 = vsel %vm1441, %v2006, %v1884
      %v2027 = vld [vmem:[%s3] sm:$0xf]
      %v2028 = vld [vmem:[%s3 + $0x4] sm:$0xf]
      %v2029 = vld [vmem:[%s3 + $0x8] sm:$0xf]
      %v2030 = vld [vmem:[%s3 + $0xc] sm:$0xf]
      %v2031 = vld [vmem:[%s3 + $0x10] sm:$0x3]
      %v2032 = vld [vmem:[%s6] sm:$0x1]
      %v2034 = vperm.slane %v2032, 0
      %v2041 = vunpack.c.l.b16 %v2027
      %v2042 = vunpack.c.l.b16 %v2028
      %v2043 = vunpack.c.l.b16 %v2029
      %v2044 = vunpack.c.l.b16 %v2030
      %v2045 = vunpack.c.l.b16 %v2031
      %v2046 = vpack.c.b16 %v2042, %v2041
      %v2047 = vpack.c.b16 %v2044, %v2043
      %v2048 = vpack.c.b16 %v2045, %v2045
      %v2051 = vsel %vm1486, %v2008, 0
      %v2053 = vsel %vm1486, %v2010, 0
      %v2055 = vsel %vm1486, %v2012, 0
      %v2057 = vsel %vm1486, %v2014, 0
      %v2059 = vsel %vm1486, %v2016, 0
      %v2061 = vsel %vm1486, %v2018, 0
      %v2063 = vsel %vm1486, %v2020, 0
      %v2065 = vsel %vm1486, %v2022, 0
      %v2067 = vsel %vm1486, %v2024, 0
      %v2069 = vsel %vm1486, %v2026, 0
      %v2072 = vsel %vm1507, %v2048, 0
      %2074 = vmatpush.bf16.msra.mxu0 0
      %2075 = vmatpush.bf16.msra.mxu0 0
      %2076 = vmatpush.bf16.msra.mxu0 0
      %2077 = vmatpush.bf16.msra.mxu0 0
      %2078 = vmatpush.bf16.msra.mxu0 0
      %2079 = vmatpush.bf16.msra.mxu0 %v2072
      %2080 = vmatpush.bf16.msra.mxu0 %v2047
      %2081 = vmatpush.bf16.msra.mxu0 %v2046
      %2082 = vmatmul.bf16.gmra.mxu0 %v2051
      %v2083 = vpop.f32.mrf.mxu0
      %v2084 = vadd.f32 %v2034, %v2083
      %v2085 = vpop.f32.mrf.mxu0
      %v2086 = vadd.f32 %v2034, %v2085
      %2087 = vmatmul.bf16.gmra.mxu0 %v2053
      %v2088 = vpop.f32.mrf.mxu0
      %v2089 = vadd.f32 %v2034, %v2088
      %v2090 = vpop.f32.mrf.mxu0
      %v2091 = vadd.f32 %v2034, %v2090
      %2092 = vmatmul.bf16.gmra.mxu0 %v2055
      %v2093 = vpop.f32.mrf.mxu0
      %v2094 = vadd.f32 %v2034, %v2093
      %v2095 = vpop.f32.mrf.mxu0
      %v2096 = vadd.f32 %v2034, %v2095
      %2097 = vmatmul.bf16.gmra.mxu0 %v2057
      %v2098 = vpop.f32.mrf.mxu0
      %v2099 = vadd.f32 %v2034, %v2098
      %v2100 = vpop.f32.mrf.mxu0
      %v2101 = vadd.f32 %v2034, %v2100
      %2102 = vmatmul.bf16.gmra.mxu0 %v2059
      %v2103 = vpop.f32.mrf.mxu0
      %v2104 = vadd.f32 %v2034, %v2103
      %v2105 = vpop.f32.mrf.mxu0
      %v2106 = vadd.f32 %v2034, %v2105
      %2107 = vmatmul.bf16.gmra.mxu0 %v2061
      %v2108 = vpop.f32.mrf.mxu0
      %v2109 = vadd.f32 %v2034, %v2108
      %v2110 = vpop.f32.mrf.mxu0
      %v2111 = vadd.f32 %v2034, %v2110
      %2112 = vmatmul.bf16.gmra.mxu0 %v2063
      %v2113 = vpop.f32.mrf.mxu0
      %v2114 = vadd.f32 %v2034, %v2113
      %v2115 = vpop.f32.mrf.mxu0
      %v2116 = vadd.f32 %v2034, %v2115
      %2117 = vmatmul.bf16.gmra.mxu0 %v2065
      %v2118 = vpop.f32.mrf.mxu0
      %v2119 = vadd.f32 %v2034, %v2118
      %v2120 = vpop.f32.mrf.mxu0
      %v2121 = vadd.f32 %v2034, %v2120
      %2122 = vmatmul.bf16.gmra.mxu0 %v2067
      %v2123 = vpop.f32.mrf.mxu0
      %v2124 = vadd.f32 %v2034, %v2123
      %v2125 = vpop.f32.mrf.mxu0
      %v2126 = vadd.f32 %v2034, %v2125
      %2127 = vmatmul.bf16.gmra.mxu0 %v2069
      %v2128 = vpop.f32.mrf.mxu0
      %v2129 = vadd.f32 %v2034, %v2128
      %v2130 = vpop.f32.mrf.mxu0
      %v2131 = vadd.f32 %v2034, %v2130
      %2132 = vdwg.mxu0
      %v2133 = vmax.f32 %v1521, 0.0
      %v2134 = vmax.f32 %v1523, 0.0
      %v2135 = vmax.f32 %v1526, 0.0
      %v2136 = vmax.f32 %v1528, 0.0
      %v2137 = vmax.f32 %v1531, 0.0
      %v2138 = vmax.f32 %v1533, 0.0
      %v2139 = vmax.f32 %v1536, 0.0
      %v2140 = vmax.f32 %v1538, 0.0
      %v2141 = vmax.f32 %v1541, 0.0
      %v2142 = vmax.f32 %v1543, 0.0
      %v2143 = vmax.f32 %v1546, 0.0
      %v2144 = vmax.f32 %v1548, 0.0
      %v2145 = vmax.f32 %v1551, 0.0
      %v2146 = vmax.f32 %v1553, 0.0
      %v2147 = vmax.f32 %v1556, 0.0
      %v2148 = vmax.f32 %v1558, 0.0
      %v2149 = vmax.f32 %v1561, 0.0
      %v2150 = vmax.f32 %v1563, 0.0
      %v2151 = vmax.f32 %v1566, 0.0
      %v2152 = vmax.f32 %v1568, 0.0
      %v2153 = vmax.f32 %v2084, 0.0
      %v2154 = vmax.f32 %v2086, 0.0
      %v2155 = vmax.f32 %v2089, 0.0
      %v2156 = vmax.f32 %v2091, 0.0
      %v2157 = vmax.f32 %v2094, 0.0
      %v2158 = vmax.f32 %v2096, 0.0
      %v2159 = vmax.f32 %v2099, 0.0
      %v2160 = vmax.f32 %v2101, 0.0
      %v2161 = vmax.f32 %v2104, 0.0
      %v2162 = vmax.f32 %v2106, 0.0
      %v2163 = vmax.f32 %v2109, 0.0
      %v2164 = vmax.f32 %v2111, 0.0
      %v2165 = vmax.f32 %v2114, 0.0
      %v2166 = vmax.f32 %v2116, 0.0
      %v2167 = vmax.f32 %v2119, 0.0
      %v2168 = vmax.f32 %v2121, 0.0
      %v2169 = vmax.f32 %v2124, 0.0
      %v2170 = vmax.f32 %v2126, 0.0
      %v2171 = vmax.f32 %v2129, 0.0
      %v2172 = vmax.f32 %v2131, 0.0
      %s2173 = smul.u32 %s24, 8
      %v2174 = vlaneseq
      %v2175 = vshrl.u32 %v2174, 7
      %v2176 = vadd.s32 %v2175, 8
      %v2177 = vadd.s32 %v2175, 16
      %v2178 = vadd.s32 %v2175, 24
      %v2179 = vadd.s32 %v2175, 32
      %v2180 = vadd.s32 %v2175, 40
      %v2181 = vadd.s32 %v2175, 48
      %v2182 = vadd.s32 %v2175, 56
      %v2183 = vadd.s32 %v2175, 64
      %v2184 = vadd.s32 %v2175, 72
      %v2185 = vadd.s32 %v2175, 80
      %v2186 = vadd.s32 %v2175, 88
      %v2187 = vadd.s32 %v2175, 96
      %v2188 = vadd.s32 %v2175, 104
      %v2189 = vadd.s32 %v2175, 112
      %v2190 = vadd.s32 %v2175, 120
      %v2191 = vadd.s32 %v2175, 128
      %v2192 = vadd.s32 %v2175, 136
      %v2193 = vadd.s32 %v2175, 144
      %v2194 = vadd.s32 %v2175, 152
      %s2195 = ssub.s32 1, %s2173
      %s2196 = smul.u32 %s2195, 16
      %v2197 = vstv %s2196
      %vm2198 = vcmp.ge.s32.totalorder %v2175, %v2197
      %vm2199 = vcmp.ge.s32.totalorder %v2176, %v2197
      %vm2200 = vcmp.ge.s32.totalorder %v2177, %v2197
      %vm2201 = vcmp.ge.s32.totalorder %v2178, %v2197
      %vm2202 = vcmp.ge.s32.totalorder %v2179, %v2197
      %vm2203 = vcmp.ge.s32.totalorder %v2180, %v2197
      %vm2204 = vcmp.ge.s32.totalorder %v2181, %v2197
      %vm2205 = vcmp.ge.s32.totalorder %v2182, %v2197
      %vm2206 = vcmp.ge.s32.totalorder %v2183, %v2197
      %vm2207 = vcmp.ge.s32.totalorder %v2184, %v2197
      %vm2208 = vcmp.ge.s32.totalorder %v2185, %v2197
      %vm2209 = vcmp.ge.s32.totalorder %v2186, %v2197
      %vm2210 = vcmp.ge.s32.totalorder %v2187, %v2197
      %vm2211 = vcmp.ge.s32.totalorder %v2188, %v2197
      %vm2212 = vcmp.ge.s32.totalorder %v2189, %v2197
      %vm2213 = vcmp.ge.s32.totalorder %v2190, %v2197
      %vm2214 = vcmp.ge.s32.totalorder %v2191, %v2197
      %vm2215 = vcmp.ge.s32.totalorder %v2192, %v2197
      %vm2216 = vcmp.ge.s32.totalorder %v2193, %v2197
      %vm2217 = vcmp.ge.s32.totalorder %v2194, %v2197
      %s2218 = ssub.s32 17, %s2173
      %s2219 = smul.u32 %s2218, 16
      %v2220 = vstv %s2219
      %vm2221 = vcmp.lt.s32.totalorder %v2175, %v2220
      %vm2222 = vcmp.lt.s32.totalorder %v2176, %v2220
      %vm2223 = vcmp.lt.s32.totalorder %v2177, %v2220
      %vm2224 = vcmp.lt.s32.totalorder %v2178, %v2220
      %vm2225 = vcmp.lt.s32.totalorder %v2179, %v2220
      %vm2226 = vcmp.lt.s32.totalorder %v2180, %v2220
      %vm2227 = vcmp.lt.s32.totalorder %v2181, %v2220
      %vm2228 = vcmp.lt.s32.totalorder %v2182, %v2220
      %vm2229 = vcmp.lt.s32.totalorder %v2183, %v2220
      %vm2230 = vcmp.lt.s32.totalorder %v2184, %v2220
      %vm2231 = vcmp.lt.s32.totalorder %v2185, %v2220
      %vm2232 = vcmp.lt.s32.totalorder %v2186, %v2220
      %vm2233 = vcmp.lt.s32.totalorder %v2187, %v2220
      %vm2234 = vcmp.lt.s32.totalorder %v2188, %v2220
      %vm2235 = vcmp.lt.s32.totalorder %v2189, %v2220
      %vm2236 = vcmp.lt.s32.totalorder %v2190, %v2220
      %vm2237 = vcmp.lt.s32.totalorder %v2191, %v2220
      %vm2238 = vcmp.lt.s32.totalorder %v2192, %v2220
      %vm2239 = vcmp.lt.s32.totalorder %v2193, %v2220
      %vm2240 = vcmp.lt.s32.totalorder %v2194, %v2220
      %vm2241 = vmand %vm2198, %vm2221
      %vm2242 = vmand %vm2199, %vm2222
      %vm2243 = vmand %vm2200, %vm2223
      %vm2244 = vmand %vm2201, %vm2224
      %vm2245 = vmand %vm2202, %vm2225
      %vm2246 = vmand %vm2203, %vm2226
      %vm2247 = vmand %vm2204, %vm2227
      %vm2248 = vmand %vm2205, %vm2228
      %vm2249 = vmand %vm2206, %vm2229
      %vm2250 = vmand %vm2207, %vm2230
      %vm2251 = vmand %vm2208, %vm2231
      %vm2252 = vmand %vm2209, %vm2232
      %vm2253 = vmand %vm2210, %vm2233
      %vm2254 = vmand %vm2211, %vm2234
      %vm2255 = vmand %vm2212, %vm2235
      %vm2256 = vmand %vm2213, %vm2236
      %vm2257 = vmand %vm2214, %vm2237
      %vm2258 = vmand %vm2215, %vm2238
      %vm2259 = vmand %vm2216, %vm2239
      %vm2260 = vmand %vm2217, %vm2240
      %v2261 = vsel %vm2241, 1, 0
      %v2262 = vsel %vm2242, 1, 0
      %v2263 = vsel %vm2243, 1, 0
      %v2264 = vsel %vm2244, 1, 0
      %v2265 = vsel %vm2245, 1, 0
      %v2266 = vsel %vm2246, 1, 0
      %v2267 = vsel %vm2247, 1, 0
      %v2268 = vsel %vm2248, 1, 0
      %v2269 = vsel %vm2249, 1, 0
      %v2270 = vsel %vm2250, 1, 0
      %v2271 = vsel %vm2251, 1, 0
      %v2272 = vsel %vm2252, 1, 0
      %v2273 = vsel %vm2253, 1, 0
      %v2274 = vsel %vm2254, 1, 0
      %v2275 = vsel %vm2255, 1, 0
      %v2276 = vsel %vm2256, 1, 0
      %v2277 = vsel %vm2257, 1, 0
      %v2278 = vsel %vm2258, 1, 0
      %v2279 = vsel %vm2259, 1, 0
      %v2280 = vsel %vm2260, 1, 0
      %vm2281 = vcmp.eq.s32.totalorder %v2261, 1
      %vm2282 = vcmp.eq.s32.totalorder %v2262, 1
      %vm2283 = vcmp.eq.s32.totalorder %v2263, 1
      %vm2284 = vcmp.eq.s32.totalorder %v2264, 1
      %vm2285 = vcmp.eq.s32.totalorder %v2265, 1
      %vm2286 = vcmp.eq.s32.totalorder %v2266, 1
      %vm2287 = vcmp.eq.s32.totalorder %v2267, 1
      %vm2288 = vcmp.eq.s32.totalorder %v2268, 1
      %vm2289 = vcmp.eq.s32.totalorder %v2269, 1
      %vm2290 = vcmp.eq.s32.totalorder %v2270, 1
      %vm2291 = vcmp.eq.s32.totalorder %v2271, 1
      %vm2292 = vcmp.eq.s32.totalorder %v2272, 1
      %vm2293 = vcmp.eq.s32.totalorder %v2273, 1
      %vm2294 = vcmp.eq.s32.totalorder %v2274, 1
      %vm2295 = vcmp.eq.s32.totalorder %v2275, 1
      %vm2296 = vcmp.eq.s32.totalorder %v2276, 1
      %vm2297 = vcmp.eq.s32.totalorder %v2277, 1
      %vm2298 = vcmp.eq.s32.totalorder %v2278, 1
      %vm2299 = vcmp.eq.s32.totalorder %v2279, 1
      %vm2300 = vcmp.eq.s32.totalorder %v2280, 1
      %v2301 = vsel %vm2281, %v2133, 0.0
      %v2302 = vsel %vm2282, %v2134, 0.0
      %v2303 = vsel %vm2283, %v2135, 0.0
      %v2304 = vsel %vm2284, %v2136, 0.0
      %v2305 = vsel %vm2285, %v2137, 0.0
      %v2306 = vsel %vm2286, %v2138, 0.0
      %v2307 = vsel %vm2287, %v2139, 0.0
      %v2308 = vsel %vm2288, %v2140, 0.0
      %v2309 = vsel %vm2289, %v2141, 0.0
      %v2310 = vsel %vm2290, %v2142, 0.0
      %v2311 = vsel %vm2291, %v2143, 0.0
      %v2312 = vsel %vm2292, %v2144, 0.0
      %v2313 = vsel %vm2293, %v2145, 0.0
      %v2314 = vsel %vm2294, %v2146, 0.0
      %v2315 = vsel %vm2295, %v2147, 0.0
      %v2316 = vsel %vm2296, %v2148, 0.0
      %v2317 = vsel %vm2297, %v2149, 0.0
      %v2318 = vsel %vm2298, %v2150, 0.0
      %v2319 = vsel %vm2299, %v2151, 0.0
      %v2320 = vsel %vm2300, %v2152, 0.0
      %v2321 = vpack.c.bf16 %v2301, %v2301
      %v2322 = vpack.c.bf16 %v2302, %v2302
      %v2323 = vpack.c.bf16 %v2303, %v2303
      %v2324 = vpack.c.bf16 %v2304, %v2304
      %v2325 = vpack.c.bf16 %v2305, %v2305
      %v2326 = vpack.c.bf16 %v2306, %v2306
      %v2327 = vpack.c.bf16 %v2307, %v2307
      %v2328 = vpack.c.bf16 %v2308, %v2308
      %v2329 = vpack.c.bf16 %v2309, %v2309
      %v2330 = vpack.c.bf16 %v2310, %v2310
      %v2331 = vpack.c.bf16 %v2311, %v2311
      %v2332 = vpack.c.bf16 %v2312, %v2312
      %v2333 = vpack.c.bf16 %v2313, %v2313
      %v2334 = vpack.c.bf16 %v2314, %v2314
      %v2335 = vpack.c.bf16 %v2315, %v2315
      %v2336 = vpack.c.bf16 %v2316, %v2316
      %v2337 = vpack.c.bf16 %v2317, %v2317
      %v2338 = vpack.c.bf16 %v2318, %v2318
      %v2339 = vpack.c.bf16 %v2319, %v2319
      %v2340 = vpack.c.bf16 %v2320, %v2320
      %v2341 = vsel %vm2281, %v2153, 0.0
      %v2342 = vsel %vm2282, %v2154, 0.0
      %v2343 = vsel %vm2283, %v2155, 0.0
      %v2344 = vsel %vm2284, %v2156, 0.0
      %v2345 = vsel %vm2285, %v2157, 0.0
      %v2346 = vsel %vm2286, %v2158, 0.0
      %v2347 = vsel %vm2287, %v2159, 0.0
      %v2348 = vsel %vm2288, %v2160, 0.0
      %v2349 = vsel %vm2289, %v2161, 0.0
      %v2350 = vsel %vm2290, %v2162, 0.0
      %v2351 = vsel %vm2291, %v2163, 0.0
      %v2352 = vsel %vm2292, %v2164, 0.0
      %v2353 = vsel %vm2293, %v2165, 0.0
      %v2354 = vsel %vm2294, %v2166, 0.0
      %v2355 = vsel %vm2295, %v2167, 0.0
      %v2356 = vsel %vm2296, %v2168, 0.0
      %v2357 = vsel %vm2297, %v2169, 0.0
      %v2358 = vsel %vm2298, %v2170, 0.0
      %v2359 = vsel %vm2299, %v2171, 0.0
      %v2360 = vsel %vm2300, %v2172, 0.0
      %v2361 = vpack.c.bf16 %v2341, %v2341
      %v2362 = vpack.c.bf16 %v2342, %v2342
      %v2363 = vpack.c.bf16 %v2343, %v2343
      %v2364 = vpack.c.bf16 %v2344, %v2344
      %v2365 = vpack.c.bf16 %v2345, %v2345
      %v2366 = vpack.c.bf16 %v2346, %v2346
      %v2367 = vpack.c.bf16 %v2347, %v2347
      %v2368 = vpack.c.bf16 %v2348, %v2348
      %v2369 = vpack.c.bf16 %v2349, %v2349
      %v2370 = vpack.c.bf16 %v2350, %v2350
      %v2371 = vpack.c.bf16 %v2351, %v2351
      %v2372 = vpack.c.bf16 %v2352, %v2352
      %v2373 = vpack.c.bf16 %v2353, %v2353
      %v2374 = vpack.c.bf16 %v2354, %v2354
      %v2375 = vpack.c.bf16 %v2355, %v2355
      %v2376 = vpack.c.bf16 %v2356, %v2356
      %v2377 = vpack.c.bf16 %v2357, %v2357
      %v2378 = vpack.c.bf16 %v2358, %v2358
      %v2379 = vpack.c.bf16 %v2359, %v2359
      %v2380 = vpack.c.bf16 %v2360, %v2360
      %v2401 = vunpack.c.l.b16 %v2321
      %v2402 = vunpack.c.l.b16 %v2322
      %v2403 = vunpack.c.l.b16 %v2323
      %v2404 = vunpack.c.l.b16 %v2324
      %v2405 = vunpack.c.l.b16 %v2325
      %v2406 = vunpack.c.l.b16 %v2326
      %v2407 = vunpack.c.l.b16 %v2327
      %v2408 = vunpack.c.l.b16 %v2328
      %v2409 = vunpack.c.l.b16 %v2329
      %v2410 = vunpack.c.l.b16 %v2330
      %v2411 = vunpack.c.l.b16 %v2331
      %v2412 = vunpack.c.l.b16 %v2332
      %v2413 = vunpack.c.l.b16 %v2333
      %v2414 = vunpack.c.l.b16 %v2334
      %v2415 = vunpack.c.l.b16 %v2335
      %v2416 = vunpack.c.l.b16 %v2336
      %v2417 = vunpack.c.l.b16 %v2337
      %v2418 = vunpack.c.l.b16 %v2338
      %v2419 = vunpack.c.l.b16 %v2339
      %v2420 = vunpack.c.l.b16 %v2340
      %v2421 = vpack.c.b16 %v2402, %v2401
      %v2422 = vpack.c.b16 %v2404, %v2403
      %v2423 = vpack.c.b16 %v2406, %v2405
      %v2424 = vpack.c.b16 %v2408, %v2407
      %v2425 = vpack.c.b16 %v2410, %v2409
      %v2426 = vpack.c.b16 %v2412, %v2411
      %v2427 = vpack.c.b16 %v2414, %v2413
      %v2428 = vpack.c.b16 %v2416, %v2415
      %v2429 = vpack.c.b16 %v2418, %v2417
      %v2430 = vpack.c.b16 %v2420, %v2419
      %v2451 = vunpack.c.l.b16 %v2361
      %v2452 = vunpack.c.l.b16 %v2362
      %v2453 = vunpack.c.l.b16 %v2363
      %v2454 = vunpack.c.l.b16 %v2364
      %v2455 = vunpack.c.l.b16 %v2365
      %v2456 = vunpack.c.l.b16 %v2366
      %v2457 = vunpack.c.l.b16 %v2367
      %v2458 = vunpack.c.l.b16 %v2368
      %v2459 = vunpack.c.l.b16 %v2369
      %v2460 = vunpack.c.l.b16 %v2370
      %v2461 = vunpack.c.l.b16 %v2371
      %v2462 = vunpack.c.l.b16 %v2372
      %v2463 = vunpack.c.l.b16 %v2373
      %v2464 = vunpack.c.l.b16 %v2374
      %v2465 = vunpack.c.l.b16 %v2375
      %v2466 = vunpack.c.l.b16 %v2376
      %v2467 = vunpack.c.l.b16 %v2377
      %v2468 = vunpack.c.l.b16 %v2378
      %v2469 = vunpack.c.l.b16 %v2379
      %v2470 = vunpack.c.l.b16 %v2380
      %v2471 = vpack.c.b16 %v2452, %v2451
      %v2472 = vpack.c.b16 %v2454, %v2453
      %v2473 = vpack.c.b16 %v2456, %v2455
      %v2474 = vpack.c.b16 %v2458, %v2457
      %v2475 = vpack.c.b16 %v2460, %v2459
      %v2476 = vpack.c.b16 %v2462, %v2461
      %v2477 = vpack.c.b16 %v2464, %v2463
      %v2478 = vpack.c.b16 %v2466, %v2465
      %v2479 = vpack.c.b16 %v2468, %v2467
      %v2480 = vpack.c.b16 %v2470, %v2469
      %2481 = vrot.lane.b32.xlu0 %v2471, 4
      %v2482 = vpop.permute.xlu0 %2481
      %2483 = vrot.lane.b32.xlu0 %v2472, 4
      %v2484 = vpop.permute.xlu0 %2483
      %2485 = vrot.lane.b32.xlu0 %v2473, 4
      %v2486 = vpop.permute.xlu0 %2485
      %2487 = vrot.lane.b32.xlu0 %v2474, 4
      %v2488 = vpop.permute.xlu0 %2487
      %2489 = vrot.lane.b32.xlu0 %v2475, 4
      %v2490 = vpop.permute.xlu0 %2489
      %2491 = vrot.lane.b32.xlu0 %v2476, 4
      %v2492 = vpop.permute.xlu0 %2491
      %2493 = vrot.lane.b32.xlu0 %v2477, 4
      %v2494 = vpop.permute.xlu0 %2493
      %2495 = vrot.lane.b32.xlu0 %v2478, 4
      %v2496 = vpop.permute.xlu0 %2495
      %2497 = vrot.lane.b32.xlu0 %v2479, 4
      %v2498 = vpop.permute.xlu0 %2497
      %2499 = vrot.lane.b32.xlu0 %v2480, 4
      %v2500 = vpop.permute.xlu0 %2499
      %v2503 = vsel %vm1284, %v2421, %v2482
      %v2506 = vsel %vm1284, %v2422, %v2484
      %v2509 = vsel %vm1284, %v2423, %v2486
      %v2512 = vsel %vm1284, %v2424, %v2488
      %v2515 = vsel %vm1284, %v2425, %v2490
      %v2518 = vsel %vm1284, %v2426, %v2492
      %v2521 = vsel %vm1284, %v2427, %v2494
      %v2524 = vsel %vm1284, %v2428, %v2496
      %v2527 = vsel %vm1284, %v2429, %v2498
      %v2530 = vsel %vm1284, %v2430, %v2500
      %v2531 = vshrl.u32 %v2503, 16
      %v2533 = vrot.slane %v2531, 7
      %v2534 = vshll.u32 %v2503, 16
      %v2536 = vor.u32 %v2533, %v2534
      %v2537 = vshrl.u32 %v2506, 16
      %v2539 = vrot.slane %v2537, 7
      %v2540 = vshll.u32 %v2506, 16
      %v2542 = vor.u32 %v2539, %v2540
      %v2543 = vshrl.u32 %v2509, 16
      %v2545 = vrot.slane %v2543, 7
      %v2546 = vshll.u32 %v2509, 16
      %v2548 = vor.u32 %v2545, %v2546
      %v2549 = vshrl.u32 %v2512, 16
      %v2551 = vrot.slane %v2549, 7
      %v2552 = vshll.u32 %v2512, 16
      %v2554 = vor.u32 %v2551, %v2552
      %v2555 = vshrl.u32 %v2515, 16
      %v2557 = vrot.slane %v2555, 7
      %v2558 = vshll.u32 %v2515, 16
      %v2560 = vor.u32 %v2557, %v2558
      %v2561 = vshrl.u32 %v2518, 16
      %v2563 = vrot.slane %v2561, 7
      %v2564 = vshll.u32 %v2518, 16
      %v2566 = vor.u32 %v2563, %v2564
      %v2567 = vshrl.u32 %v2521, 16
      %v2569 = vrot.slane %v2567, 7
      %v2570 = vshll.u32 %v2521, 16
      %v2572 = vor.u32 %v2569, %v2570
      %v2573 = vshrl.u32 %v2524, 16
      %v2575 = vrot.slane %v2573, 7
      %v2576 = vshll.u32 %v2524, 16
      %v2578 = vor.u32 %v2575, %v2576
      %v2579 = vshrl.u32 %v2527, 16
      %v2581 = vrot.slane %v2579, 7
      %v2582 = vshll.u32 %v2527, 16
      %v2584 = vor.u32 %v2581, %v2582
      %v2585 = vshrl.u32 %v2530, 16
      %v2587 = vrot.slane %v2585, 7
      %v2588 = vshll.u32 %v2530, 16
      %v2590 = vor.u32 %v2587, %v2588
      %vm2611 = vcmask 1040384
      %vm2612 = vsmask.f32 256
      %vm2613 = vmand %vm2611, %vm2612
      %v2614 = vsel %vm2613, 0, %v2536
      %v2615 = vsel %vm2613, 0, %v2542
      %v2616 = vsel %vm2613, 0, %v2548
      %v2617 = vsel %vm2613, 0, %v2554
      %v2618 = vsel %vm2613, 0, %v2560
      %v2619 = vsel %vm2613, 0, %v2566
      %v2620 = vsel %vm2613, 0, %v2572
      %v2621 = vsel %vm2613, 0, %v2578
      %v2622 = vsel %vm2613, 0, %v2584
      %v2623 = vsel %vm2613, 0, %v2590
      %v2624 = vsel %vm2613, %v2533, 0
      %v2625 = vsel %vm2613, %v2539, 0
      %v2626 = vsel %vm2613, %v2545, 0
      %v2627 = vsel %vm2613, %v2551, 0
      %v2628 = vsel %vm2613, %v2557, 0
      %v2629 = vsel %vm2613, %v2563, 0
      %v2630 = vsel %vm2613, %v2569, 0
      %v2631 = vsel %vm2613, %v2575, 0
      %v2632 = vsel %vm2613, %v2581, 0
      %v2633 = vsel %vm2613, %v2587, 0
      %vm2634 = vsmask.f32 7424
      %v2636 = vshrl.u32 %v2614, 16
      %v2638 = vshll.u32 %v2614, 16
      %v2640 = vrot.slane %v2638, 1
      %v2641 = vor.u32 %v2636, %v2640
      %v2643 = vshll.u32 %v2624, 16
      %v2645 = vrot.slane %v2643, 1
      %v2646 = vsel %vm2634, %v2641, %v2645
      %v2648 = vshrl.u32 %v2615, 16
      %v2650 = vshll.u32 %v2615, 16
      %v2652 = vrot.slane %v2650, 1
      %v2653 = vor.u32 %v2648, %v2652
      %v2655 = vshll.u32 %v2625, 16
      %v2657 = vrot.slane %v2655, 1
      %v2658 = vsel %vm2634, %v2653, %v2657
      %v2660 = vshrl.u32 %v2616, 16
      %v2662 = vshll.u32 %v2616, 16
      %v2664 = vrot.slane %v2662, 1
      %v2665 = vor.u32 %v2660, %v2664
      %v2667 = vshll.u32 %v2626, 16
      %v2669 = vrot.slane %v2667, 1
      %v2670 = vsel %vm2634, %v2665, %v2669
      %v2672 = vshrl.u32 %v2617, 16
      %v2674 = vshll.u32 %v2617, 16
      %v2676 = vrot.slane %v2674, 1
      %v2677 = vor.u32 %v2672, %v2676
      %v2679 = vshll.u32 %v2627, 16
      %v2681 = vrot.slane %v2679, 1
      %v2682 = vsel %vm2634, %v2677, %v2681
      %v2684 = vshrl.u32 %v2618, 16
      %v2686 = vshll.u32 %v2618, 16
      %v2688 = vrot.slane %v2686, 1
      %v2689 = vor.u32 %v2684, %v2688
      %v2691 = vshll.u32 %v2628, 16
      %v2693 = vrot.slane %v2691, 1
      %v2694 = vsel %vm2634, %v2689, %v2693
      %v2696 = vshrl.u32 %v2619, 16
      %v2698 = vshll.u32 %v2619, 16
      %v2700 = vrot.slane %v2698, 1
      %v2701 = vor.u32 %v2696, %v2700
      %v2703 = vshll.u32 %v2629, 16
      %v2705 = vrot.slane %v2703, 1
      %v2706 = vsel %vm2634, %v2701, %v2705
      %v2708 = vshrl.u32 %v2620, 16
      %v2710 = vshll.u32 %v2620, 16
      %v2712 = vrot.slane %v2710, 1
      %v2713 = vor.u32 %v2708, %v2712
      %v2715 = vshll.u32 %v2630, 16
      %v2717 = vrot.slane %v2715, 1
      %v2718 = vsel %vm2634, %v2713, %v2717
      %v2720 = vshrl.u32 %v2621, 16
      %v2722 = vshll.u32 %v2621, 16
      %v2724 = vrot.slane %v2722, 1
      %v2725 = vor.u32 %v2720, %v2724
      %v2727 = vshll.u32 %v2631, 16
      %v2729 = vrot.slane %v2727, 1
      %v2730 = vsel %vm2634, %v2725, %v2729
      %v2732 = vshrl.u32 %v2622, 16
      %v2734 = vshll.u32 %v2622, 16
      %v2736 = vrot.slane %v2734, 1
      %v2737 = vor.u32 %v2732, %v2736
      %v2739 = vshll.u32 %v2632, 16
      %v2741 = vrot.slane %v2739, 1
      %v2742 = vsel %vm2634, %v2737, %v2741
      %v2744 = vshrl.u32 %v2623, 16
      %v2746 = vshll.u32 %v2623, 16
      %v2748 = vrot.slane %v2746, 1
      %v2749 = vor.u32 %v2744, %v2748
      %v2751 = vshll.u32 %v2633, 16
      %v2753 = vrot.slane %v2751, 1
      %v2754 = vsel %vm2634, %v2749, %v2753
      %vm2771 = vcmask 1046528
      %v2772 = vrot.slane %v2614, 1
      %v2773 = vrot.slane %v2624, 1
      %v2774 = vsel %vm2771, %v2772, %v2773
      %v2775 = vrot.slane %v2615, 1
      %v2776 = vrot.slane %v2625, 1
      %v2777 = vsel %vm2771, %v2775, %v2776
      %v2778 = vrot.slane %v2616, 1
      %v2779 = vrot.slane %v2626, 1
      %v2780 = vsel %vm2771, %v2778, %v2779
      %v2781 = vrot.slane %v2617, 1
      %v2782 = vrot.slane %v2627, 1
      %v2783 = vsel %vm2771, %v2781, %v2782
      %v2784 = vrot.slane %v2618, 1
      %v2785 = vrot.slane %v2628, 1
      %v2786 = vsel %vm2771, %v2784, %v2785
      %v2787 = vrot.slane %v2619, 1
      %v2788 = vrot.slane %v2629, 1
      %v2789 = vsel %vm2771, %v2787, %v2788
      %v2790 = vrot.slane %v2620, 1
      %v2791 = vrot.slane %v2630, 1
      %v2792 = vsel %vm2771, %v2790, %v2791
      %v2793 = vrot.slane %v2621, 1
      %v2794 = vrot.slane %v2631, 1
      %v2795 = vsel %vm2771, %v2793, %v2794
      %v2798 = vrot.slane %v2622, 1
      %v2799 = vrot.slane %v2632, 1
      %v2800 = vsel %vm2771, %v2798, %v2799
      %v2803 = vrot.slane %v2623, 1
      %v2804 = vrot.slane %v2633, 1
      %v2805 = vsel %vm2771, %v2803, %v2804
      %2806 = vrot.lane.b32.xlu0 %v2615, 8
      %v2807 = vpop.permute.xlu0 %2806
      %2808 = vrot.lane.b32.xlu0 %v2616, 8
      %v2809 = vpop.permute.xlu0 %2808
      %2810 = vrot.lane.b32.xlu0 %v2617, 8
      %v2811 = vpop.permute.xlu0 %2810
      %2812 = vrot.lane.b32.xlu0 %v2618, 8
      %v2813 = vpop.permute.xlu0 %2812
      %2814 = vrot.lane.b32.xlu0 %v2619, 8
      %v2815 = vpop.permute.xlu0 %2814
      %2816 = vrot.lane.b32.xlu0 %v2620, 8
      %v2817 = vpop.permute.xlu0 %2816
      %2818 = vrot.lane.b32.xlu0 %v2621, 8
      %v2819 = vpop.permute.xlu0 %2818
      %2820 = vrot.lane.b32.xlu0 %v2622, 8
      %v2821 = vpop.permute.xlu0 %2820
      %2822 = vrot.lane.b32.xlu0 %v2616, 16
      %v2823 = vpop.permute.xlu0 %2822
      %2824 = vrot.lane.b32.xlu0 %v2617, 16
      %v2825 = vpop.permute.xlu0 %2824
      %2826 = vrot.lane.b32.xlu0 %v2618, 16
      %v2827 = vpop.permute.xlu0 %2826
      %2828 = vrot.lane.b32.xlu0 %v2619, 16
      %v2829 = vpop.permute.xlu0 %2828
      %2830 = vrot.lane.b32.xlu0 %v2620, 16
      %v2831 = vpop.permute.xlu0 %2830
      %2832 = vrot.lane.b32.xlu0 %v2621, 16
      %v2833 = vpop.permute.xlu0 %2832
      %2834 = vrot.lane.b32.xlu0 %v2622, 16
      %v2835 = vpop.permute.xlu0 %2834
      %2836 = vrot.lane.b32.xlu0 %v2623, 16
      %v2837 = vpop.permute.xlu0 %2836
      %2838 = vrot.lane.b32.xlu0 %v2646, 24
      %v2839 = vpop.permute.xlu0 %2838
      %2840 = vrot.lane.b32.xlu0 %v2658, 24
      %v2841 = vpop.permute.xlu0 %2840
      %2842 = vrot.lane.b32.xlu0 %v2670, 24
      %v2843 = vpop.permute.xlu0 %2842
      %2844 = vrot.lane.b32.xlu0 %v2682, 24
      %v2845 = vpop.permute.xlu0 %2844
      %2846 = vrot.lane.b32.xlu0 %v2694, 24
      %v2847 = vpop.permute.xlu0 %2846
      %2848 = vrot.lane.b32.xlu0 %v2706, 24
      %v2849 = vpop.permute.xlu0 %2848
      %2850 = vrot.lane.b32.xlu0 %v2718, 24
      %v2851 = vpop.permute.xlu0 %2850
      %2852 = vrot.lane.b32.xlu0 %v2730, 24
      %v2853 = vpop.permute.xlu0 %2852
      %2854 = vrot.lane.b32.xlu0 %v2658, 32
      %v2855 = vpop.permute.xlu0 %2854
      %2856 = vrot.lane.b32.xlu0 %v2670, 32
      %v2857 = vpop.permute.xlu0 %2856
      %2858 = vrot.lane.b32.xlu0 %v2682, 32
      %v2859 = vpop.permute.xlu0 %2858
      %2860 = vrot.lane.b32.xlu0 %v2694, 32
      %v2861 = vpop.permute.xlu0 %2860
      %2862 = vrot.lane.b32.xlu0 %v2706, 32
      %v2863 = vpop.permute.xlu0 %2862
      %2864 = vrot.lane.b32.xlu0 %v2718, 32
      %v2865 = vpop.permute.xlu0 %2864
      %2866 = vrot.lane.b32.xlu0 %v2730, 32
      %v2867 = vpop.permute.xlu0 %2866
      %2868 = vrot.lane.b32.xlu0 %v2742, 32
      %v2869 = vpop.permute.xlu0 %2868
      %2870 = vrot.lane.b32.xlu0 %v2670, 40
      %v2871 = vpop.permute.xlu0 %2870
      %2872 = vrot.lane.b32.xlu0 %v2682, 40
      %v2873 = vpop.permute.xlu0 %2872
      %2874 = vrot.lane.b32.xlu0 %v2694, 40
      %v2875 = vpop.permute.xlu0 %2874
      %2876 = vrot.lane.b32.xlu0 %v2706, 40
      %v2877 = vpop.permute.xlu0 %2876
      %2878 = vrot.lane.b32.xlu0 %v2718, 40
      %v2879 = vpop.permute.xlu0 %2878
      %2880 = vrot.lane.b32.xlu0 %v2730, 40
      %v2881 = vpop.permute.xlu0 %2880
      %2882 = vrot.lane.b32.xlu0 %v2742, 40
      %v2883 = vpop.permute.xlu0 %2882
      %2884 = vrot.lane.b32.xlu0 %v2754, 40
      %v2885 = vpop.permute.xlu0 %2884
      %2886 = vrot.lane.b32.xlu0 %v2774, 48
      %v2887 = vpop.permute.xlu0 %2886
      %2888 = vrot.lane.b32.xlu0 %v2777, 48
      %v2889 = vpop.permute.xlu0 %2888
      %2890 = vrot.lane.b32.xlu0 %v2780, 48
      %v2891 = vpop.permute.xlu0 %2890
      %2892 = vrot.lane.b32.xlu0 %v2783, 48
      %v2893 = vpop.permute.xlu0 %2892
      %2894 = vrot.lane.b32.xlu0 %v2786, 48
      %v2895 = vpop.permute.xlu0 %2894
      %2896 = vrot.lane.b32.xlu0 %v2789, 48
      %v2897 = vpop.permute.xlu0 %2896
      %2898 = vrot.lane.b32.xlu0 %v2792, 48
      %v2899 = vpop.permute.xlu0 %2898
      %2900 = vrot.lane.b32.xlu0 %v2795, 48
      %v2901 = vpop.permute.xlu0 %2900
      %2902 = vrot.lane.b32.xlu0 %v2777, 56
      %v2903 = vpop.permute.xlu0 %2902
      %2904 = vrot.lane.b32.xlu0 %v2780, 56
      %v2905 = vpop.permute.xlu0 %2904
      %2906 = vrot.lane.b32.xlu0 %v2783, 56
      %v2907 = vpop.permute.xlu0 %2906
      %2908 = vrot.lane.b32.xlu0 %v2786, 56
      %v2909 = vpop.permute.xlu0 %2908
      %2910 = vrot.lane.b32.xlu0 %v2789, 56
      %v2911 = vpop.permute.xlu0 %2910
      %2912 = vrot.lane.b32.xlu0 %v2792, 56
      %v2913 = vpop.permute.xlu0 %2912
      %2914 = vrot.lane.b32.xlu0 %v2795, 56
      %v2915 = vpop.permute.xlu0 %2914
      %2916 = vrot.lane.b32.xlu0 %v2800, 56
      %v2917 = vpop.permute.xlu0 %2916
      %2918 = vrot.lane.b32.xlu0 %v2780, 64
      %v2919 = vpop.permute.xlu0 %2918
      %2920 = vrot.lane.b32.xlu0 %v2783, 64
      %v2921 = vpop.permute.xlu0 %2920
      %2922 = vrot.lane.b32.xlu0 %v2786, 64
      %v2923 = vpop.permute.xlu0 %2922
      %2924 = vrot.lane.b32.xlu0 %v2789, 64
      %v2925 = vpop.permute.xlu0 %2924
      %2926 = vrot.lane.b32.xlu0 %v2792, 64
      %v2927 = vpop.permute.xlu0 %2926
      %2928 = vrot.lane.b32.xlu0 %v2795, 64
      %v2929 = vpop.permute.xlu0 %2928
      %2930 = vrot.lane.b32.xlu0 %v2800, 64
      %v2931 = vpop.permute.xlu0 %2930
      %2932 = vrot.lane.b32.xlu0 %v2805, 64
      %v2933 = vpop.permute.xlu0 %2932
      %v2935 = vsel %vm1315, %v2614, %v2807
      %v2937 = vsel %vm1315, %v2615, %v2809
      %v2939 = vsel %vm1315, %v2616, %v2811
      %v2941 = vsel %vm1315, %v2617, %v2813
      %v2943 = vsel %vm1315, %v2618, %v2815
      %v2945 = vsel %vm1315, %v2619, %v2817
      %v2947 = vsel %vm1315, %v2620, %v2819
      %v2949 = vsel %vm1315, %v2621, %v2821
      %v2951 = vsel %vm1357, %v2935, %v2823
      %v2953 = vsel %vm1357, %v2937, %v2825
      %v2955 = vsel %vm1357, %v2939, %v2827
      %v2957 = vsel %vm1357, %v2941, %v2829
      %v2959 = vsel %vm1357, %v2943, %v2831
      %v2961 = vsel %vm1357, %v2945, %v2833
      %v2963 = vsel %vm1357, %v2947, %v2835
      %v2965 = vsel %vm1357, %v2949, %v2837
      %v2967 = vsel %vm1399, %v2951, %v2839
      %v2969 = vsel %vm1399, %v2953, %v2841
      %v2971 = vsel %vm1399, %v2955, %v2843
      %v2973 = vsel %vm1399, %v2957, %v2845
      %v2975 = vsel %vm1399, %v2959, %v2847
      %v2977 = vsel %vm1399, %v2961, %v2849
      %v2979 = vsel %vm1399, %v2963, %v2851
      %v2981 = vsel %vm1399, %v2965, %v2853
      %v2983 = vsel %vm1441, %v2967, %v2855
      %v2985 = vsel %vm1441, %v2969, %v2857
      %v2987 = vsel %vm1441, %v2971, %v2859
      %v2989 = vsel %vm1441, %v2973, %v2861
      %v2991 = vsel %vm1441, %v2975, %v2863
      %v2993 = vsel %vm1441, %v2977, %v2865
      %v2995 = vsel %vm1441, %v2979, %v2867
      %v2997 = vsel %vm1441, %v2981, %v2869
      %vm2998 = vcmask 326656
      %v3000 = vsel %vm2998, %v2983, %v2871
      %v3002 = vsel %vm2998, %v2985, %v2873
      %v3004 = vsel %vm2998, %v2987, %v2875
      %v3006 = vsel %vm2998, %v2989, %v2877
      %v3008 = vsel %vm2998, %v2991, %v2879
      %v3010 = vsel %vm2998, %v2993, %v2881
      %v3012 = vsel %vm2998, %v2995, %v2883
      %v3014 = vsel %vm2998, %v2997, %v2885
      %vm3015 = vcmask 392192
      %v3017 = vsel %vm3015, %v3000, %v2887
      %v3019 = vsel %vm3015, %v3002, %v2889
      %v3021 = vsel %vm3015, %v3004, %v2891
      %v3023 = vsel %vm3015, %v3006, %v2893
      %v3025 = vsel %vm3015, %v3008, %v2895
      %v3027 = vsel %vm3015, %v3010, %v2897
      %v3029 = vsel %vm3015, %v3012, %v2899
      %v3031 = vsel %vm3015, %v3014, %v2901
      %vm3032 = vcmask 457728
      %v3034 = vsel %vm3032, %v3017, %v2903
      %v3036 = vsel %vm3032, %v3019, %v2905
      %v3038 = vsel %vm3032, %v3021, %v2907
      %v3040 = vsel %vm3032, %v3023, %v2909
      %v3042 = vsel %vm3032, %v3025, %v2911
      %v3044 = vsel %vm3032, %v3027, %v2913
      %v3046 = vsel %vm3032, %v3029, %v2915
      %v3048 = vsel %vm3032, %v3031, %v2917
      %vm3049 = vcmask 523264
      %v3051 = vsel %vm3049, %v3034, %v2919
      %v3053 = vsel %vm3049, %v3036, %v2921
      %v3055 = vsel %vm3049, %v3038, %v2923
      %v3057 = vsel %vm3049, %v3040, %v2925
      %v3059 = vsel %vm3049, %v3042, %v2927
      %v3061 = vsel %vm3049, %v3044, %v2929
      %v3063 = vsel %vm3049, %v3046, %v2931
      %v3065 = vsel %vm3049, %v3048, %v2933
      %v3066 = vld [vmem:[%s4] sm:$0xf]
      %v3067 = vld [vmem:[%s4 + $0x4] sm:$0xf]
      %v3068 = vld [vmem:[%s4 + $0x8] sm:$0xf]
      %v3069 = vld [vmem:[%s4 + $0xc] sm:$0xf]
      %v3070 = vld [vmem:[%s4 + $0x10] sm:$0xf]
      %v3071 = vld [vmem:[%s4 + $0x14] sm:$0xf]
      %v3072 = vld [vmem:[%s4 + $0x18] sm:$0xf]
      %v3073 = vld [vmem:[%s4 + $0x1c] sm:$0xf]
      %v3074 = vld [vmem:[%s4 + $0x20] sm:$0xf]
      %v3075 = vld [vmem:[%s7] sm:$0x1]
      %v3077 = vperm.slane %v3075, 0
      %v3088 = vunpack.c.l.b16 %v3066
      %v3089 = vunpack.c.l.b16 %v3067
      %v3090 = vunpack.c.l.b16 %v3068
      %v3091 = vunpack.c.l.b16 %v3069
      %v3092 = vunpack.c.l.b16 %v3070
      %v3093 = vunpack.c.l.b16 %v3071
      %v3094 = vunpack.c.l.b16 %v3072
      %v3095 = vunpack.c.l.b16 %v3073
      %v3096 = vunpack.c.l.b16 %v3074
      %v3097 = vpack.c.b16 %v3089, %v3088
      %v3098 = vpack.c.b16 %v3091, %v3090
      %v3099 = vpack.c.b16 %v3093, %v3092
      %v3100 = vpack.c.b16 %v3095, %v3094
      %v3101 = vpack.c.b16 %v3096, %v3096
      %vm3106 = vcmask 588800
      %v3107 = vsel %vm3106, %v3051, 0
      %v3109 = vsel %vm3106, %v3053, 0
      %v3111 = vsel %vm3106, %v3055, 0
      %v3113 = vsel %vm3106, %v3057, 0
      %v3115 = vsel %vm3106, %v3059, 0
      %v3117 = vsel %vm3106, %v3061, 0
      %v3119 = vsel %vm3106, %v3063, 0
      %v3121 = vsel %vm3106, %v3065, 0
      %vm3123 = vcmask 1043456
      %v3125 = vsel %vm3123, %v3101, 0
      %3127 = vmatpush.bf16.msra.mxu0 0
      %3128 = vmatpush.bf16.msra.mxu0 0
      %3129 = vmatpush.bf16.msra.mxu0 0
      %3130 = vmatpush.bf16.msra.mxu0 %v3125
      %3131 = vmatpush.bf16.msra.mxu0 %v3100
      %3132 = vmatpush.bf16.msra.mxu0 %v3099
      %3133 = vmatpush.bf16.msra.mxu0 %v3098
      %3134 = vmatpush.bf16.msra.mxu0 %v3097
      %3135 = vmatmul.bf16.gmra.mxu0 %v3107
      %v3136 = vpop.f32.mrf.mxu0
      %v3137 = vadd.f32 %v3077, %v3136
      %v3138 = vpop.f32.mrf.mxu0
      %v3139 = vadd.f32 %v3077, %v3138
      %3140 = vmatmul.bf16.gmra.mxu0 %v3109
      %v3141 = vpop.f32.mrf.mxu0
      %v3142 = vadd.f32 %v3077, %v3141
      %v3143 = vpop.f32.mrf.mxu0
      %v3144 = vadd.f32 %v3077, %v3143
      %3145 = vmatmul.bf16.gmra.mxu0 %v3111
      %v3146 = vpop.f32.mrf.mxu0
      %v3147 = vadd.f32 %v3077, %v3146
      %v3148 = vpop.f32.mrf.mxu0
      %v3149 = vadd.f32 %v3077, %v3148
      %3150 = vmatmul.bf16.gmra.mxu0 %v3113
      %v3151 = vpop.f32.mrf.mxu0
      %v3152 = vadd.f32 %v3077, %v3151
      %v3153 = vpop.f32.mrf.mxu0
      %v3154 = vadd.f32 %v3077, %v3153
      %3155 = vmatmul.bf16.gmra.mxu0 %v3115
      %v3156 = vpop.f32.mrf.mxu0
      %v3157 = vadd.f32 %v3077, %v3156
      %v3158 = vpop.f32.mrf.mxu0
      %v3159 = vadd.f32 %v3077, %v3158
      %3160 = vmatmul.bf16.gmra.mxu0 %v3117
      %v3161 = vpop.f32.mrf.mxu0
      %v3162 = vadd.f32 %v3077, %v3161
      %v3163 = vpop.f32.mrf.mxu0
      %v3164 = vadd.f32 %v3077, %v3163
      %3165 = vmatmul.bf16.gmra.mxu0 %v3119
      %v3166 = vpop.f32.mrf.mxu0
      %v3167 = vadd.f32 %v3077, %v3166
      %v3168 = vpop.f32.mrf.mxu0
      %v3169 = vadd.f32 %v3077, %v3168
      %3170 = vmatmul.bf16.gmra.mxu0 %v3121
      %v3171 = vpop.f32.mrf.mxu0
      %v3172 = vadd.f32 %v3077, %v3171
      %v3173 = vpop.f32.mrf.mxu0
      %v3174 = vadd.f32 %v3077, %v3173
      %3175 = vdwg.mxu0
      %v3176 = vmax.f32 %v3137, 0.0
      %v3177 = vmax.f32 %v3139, 0.0
      %v3178 = vmax.f32 %v3142, 0.0
      %v3179 = vmax.f32 %v3144, 0.0
      %v3180 = vmax.f32 %v3147, 0.0
      %v3181 = vmax.f32 %v3149, 0.0
      %v3182 = vmax.f32 %v3152, 0.0
      %v3183 = vmax.f32 %v3154, 0.0
      %v3184 = vmax.f32 %v3157, 0.0
      %v3185 = vmax.f32 %v3159, 0.0
      %v3186 = vmax.f32 %v3162, 0.0
      %v3187 = vmax.f32 %v3164, 0.0
      %v3188 = vmax.f32 %v3167, 0.0
      %v3189 = vmax.f32 %v3169, 0.0
      %v3190 = vmax.f32 %v3172, 0.0
      %v3191 = vmax.f32 %v3174, 0.0
      %v3192 = vld [vmem:[%s364] sm:$0xff]
      %v3193 = vld [vmem:[%s364 + $0x8] sm:$0xff]
      %v3194 = vld [vmem:[%s364 + $0x10] sm:$0xff]
      %v3195 = vld [vmem:[%s364 + $0x18] sm:$0xff]
      %v3196 = vld [vmem:[%s364 + $0x20] sm:$0xff]
      %v3197 = vld [vmem:[%s364 + $0x28] sm:$0xff]
      %v3198 = vld [vmem:[%s364 + $0x30] sm:$0xff]
      %v3199 = vld [vmem:[%s364 + $0x38] sm:$0xff]
      %v3200 = vld [vmem:[%s364 + $0x40] sm:$0xff]
      %v3201 = vld [vmem:[%s364 + $0x48] sm:$0xff]
      %v3202 = vld [vmem:[%s364 + $0x50] sm:$0xff]
      %v3203 = vld [vmem:[%s364 + $0x58] sm:$0xff]
      %v3204 = vld [vmem:[%s364 + $0x60] sm:$0xff]
      %v3205 = vld [vmem:[%s364 + $0x68] sm:$0xff]
      %v3206 = vld [vmem:[%s364 + $0x70] sm:$0xff]
      %v3207 = vld [vmem:[%s364 + $0x78] sm:$0xff]
      %v3208 = vadd.f32 %v3176, %v3192
      %v3209 = vadd.f32 %v3177, %v3193
      %v3210 = vadd.f32 %v3178, %v3194
      %v3211 = vadd.f32 %v3179, %v3195
      %v3212 = vadd.f32 %v3180, %v3196
      %v3213 = vadd.f32 %v3181, %v3197
      %v3214 = vadd.f32 %v3182, %v3198
      %v3215 = vadd.f32 %v3183, %v3199
      %v3216 = vadd.f32 %v3184, %v3200
      %v3217 = vadd.f32 %v3185, %v3201
      %v3218 = vadd.f32 %v3186, %v3202
      %v3219 = vadd.f32 %v3187, %v3203
      %v3220 = vadd.f32 %v3188, %v3204
      %v3221 = vadd.f32 %v3189, %v3205
      %v3222 = vadd.f32 %v3190, %v3206
      %v3223 = vadd.f32 %v3191, %v3207
      %3224 = vst.msk [vmem:[%s373] sm:$0xff] %vm1284, %v3208
      %3225 = vst.msk [vmem:[%s373 + $0x8] sm:$0xff] %vm1284, %v3209
      %3226 = vst.msk [vmem:[%s373 + $0x10] sm:$0xff] %vm1284, %v3210
      %3227 = vst.msk [vmem:[%s373 + $0x18] sm:$0xff] %vm1284, %v3211
      %3228 = vst.msk [vmem:[%s373 + $0x20] sm:$0xff] %vm1284, %v3212
      %3229 = vst.msk [vmem:[%s373 + $0x28] sm:$0xff] %vm1284, %v3213
      %3230 = vst.msk [vmem:[%s373 + $0x30] sm:$0xff] %vm1284, %v3214
      %3231 = vst.msk [vmem:[%s373 + $0x38] sm:$0xff] %vm1284, %v3215
      %3232 = vst.msk [vmem:[%s373 + $0x40] sm:$0xff] %vm1284, %v3216
      %3233 = vst.msk [vmem:[%s373 + $0x48] sm:$0xff] %vm1284, %v3217
      %3234 = vst.msk [vmem:[%s373 + $0x50] sm:$0xff] %vm1284, %v3218
      %3235 = vst.msk [vmem:[%s373 + $0x58] sm:$0xff] %vm1284, %v3219
      %3236 = vst.msk [vmem:[%s373 + $0x60] sm:$0xff] %vm1284, %v3220
      %3237 = vst.msk [vmem:[%s373 + $0x68] sm:$0xff] %vm1284, %v3221
      %3238 = vst.msk [vmem:[%s373 + $0x70] sm:$0xff] %vm1284, %v3222
      %3239 = vst.msk [vmem:[%s373 + $0x78] sm:$0xff] %vm1284, %v3223
      %s3240 = smul.u32 %s23, 2
      %s3241 = sadd.s32 %s3240, %s24
      %p3242 = scmp.lt.s32.totalorder %s3241, 3
      %s3243 = scalar_select %p3242, %s3241, 3
      %s3244 = smul.addr %s3243, 16
      %s3245 = smul.addr %s3244, 8
      %s3246 = scalar_lea.vmem %s8, %s3245
      // Predicated region
      $region53: #{tpu_custom_call.1} parent=51 // pred_check
        %p3247 = pneg %p239
      $region54: #{tpu_custom_call.1} parent=51 // pred_check_branch
        %3249 = sbr.rel (%p3247) target = $region56
      $region55: #{tpu_custom_call.1} parent=51 // pred_region
        %s3250 = smul.u32 %s23, 2
        %s3251 = sadd.s32 %s3250, %s24
      $region56: #{tpu_custom_call.1} parent=51 // pred_fallthru
        _
    $region52: #{tpu_custom_call.1} parent=5 // pred_fallthru
      _
    %p3252 = scmp.le.s32.totalorder 2, %s14
    // Predicated region
    $region57: #{tpu_custom_call.1} parent=5 // pred_check
      %p3253 = pneg %p3252
    $region58: #{tpu_custom_call.1} parent=5 // pred_check_branch
      %3255 = sbr.rel (%p3253) target = $region60
    $region59: #{tpu_custom_call.1} parent=5 // pred_region
      %s3256 = ssub.s32 %s14, 2
      // Predicated region
      $region61: #{tpu_custom_call.1} parent=59 // pred_check
        %p3257 = pneg %p245
      $region62: #{tpu_custom_call.1} parent=59 // pred_check_branch
        %3259 = sbr.rel (%p3257) target = $region64
      $region63: #{tpu_custom_call.1} parent=59 // pred_region
        %s3260 = smul.u32 %s25, 2
        %s3261 = sadd.s32 %s3260, %s26
        %p3262 = scmp.lt.s32.totalorder %s3261, 3
        %s3263 = scalar_select %p3262, %s3261, 3
        %s3264 = smul.addr %s3263, 16
        %s3265 = smul.addr %s3264, 8
        %s3266 = scalar_lea.vmem %s8, %s3265
      $region64: #{tpu_custom_call.1} parent=59 // pred_fallthru
        _
    $region60: #{tpu_custom_call.1} parent=5 // pred_fallthru
      _
  $region6: #{tpu_custom_call.1} parent=0 // loop_footer
    %s18 = sadd.s32 1, %s14
  $region7: #{tpu_custom_call.1} parent=0 // loop_footer_branch
    %13 = sbr.rel target = $region3
  $region8: #{tpu_custom_call.1} parent=0 // loop_exit
    _

</llo_original>
